<compile_context>
chip_gen: v7x
topology: tpu7x:2x2x1
jax: 0.10.0
libtpu: 0.0.40
codegen_flags: <defaults>
</compile_context>

<pallas_src>
import functools

import numpy as np

import jax
import jax.numpy as jnp
from jax import lax
from jax.experimental import pallas as pl
from jax.experimental.pallas import tpu as pltpu


def _ball_group_kernel(xyz_ref, cen_ref, pts_ref, out_ref, *, r2, K, C):
    xyz = xyz_ref[0].astype(jnp.float32)     # (N, 3)   n on sublanes
    cenT = cen_ref[0].astype(jnp.float32)    # (3, TM)  m on lanes
    ptsT = pts_ref[0].astype(jnp.float32)    # (D, N)   n on lanes (lane-dense)
    N = xyz.shape[0]
    TM = cenT.shape[1]

    # ---- pairwise squared distance, (N, TM): n on sublanes, m on lanes -------
    d2 = jnp.zeros((N, TM), jnp.float32)
    for j in range(3):
        diff = xyz[:, j:j + 1] - cenT[j:j + 1, :]          # (N,1) - (1,TM)
        d2 = d2 + diff * diff
    in_ball = d2 < r2                                       # (N, TM) bool

    # ---- exact integer rank: prefix sum over n (shift-and-add, log2(N) steps)
    # rank[n, m] = number of in-ball points with index <= n   (exact int32).
    rank = in_ball.astype(jnp.int32)
    off = 1
    while off < N:
        shifted = jnp.concatenate(
            [jnp.zeros((off, TM), jnp.int32), rank[:N - off, :]], axis=0)
        rank = rank + shifted
        off *= 2
    cnt = rank[N - 1:N, :]                                  # (1, TM)

    # fill rules of the CUDA ball_query kernel
    row0 = lax.broadcasted_iota(jnp.int32, (N, 1), 0) == 0  # (N, 1)
    empty_fill = (cnt == 0) & row0                          # empty ball -> index 0
    dup_base = in_ball & (rank == 1)                        # first hit, reused k>=cnt

    # centroid offset applied to the xyz channels only
    if C > 0:
        offset = jnp.concatenate(
            [cenT, jnp.zeros((C, TM), jnp.float32)], axis=0)    # (D, TM)
    else:
        offset = cenT

    # Split the f32 point table into hi/lo bf16 planes: sel rows are one-hot so
    # two bf16 MXU matmuls reproduce the f32 gather to ~1e-6 relative accuracy.
    pts_hi = ptsT.astype(jnp.bfloat16)                          # (D, N)
    pts_lo = (ptsT - pts_hi.astype(jnp.float32)).astype(jnp.bfloat16)

    for k in range(K):                                          # K is small/static
        sel = (in_ball & (rank == k + 1)) | (dup_base & (cnt <= k)) | empty_fill
        sel_bf = sel.astype(jnp.float32).astype(jnp.bfloat16)   # (N, TM), exact 0/1
        g = jnp.dot(pts_hi, sel_bf, preferred_element_type=jnp.float32)
        g = g + jnp.dot(pts_lo, sel_bf, preferred_element_type=jnp.float32)
        out_ref[0, k, :, :] = (g - offset).astype(out_ref.dtype)   # (D, TM) tile


def _choose_tile_m(M, N):
    """Centroid-tile size: multiple of 128 dividing M (lane-dense sel / stores),
    bounded so the (N, TM) f32/int32 working set stays well inside scoped VMEM
    (sized for v7x's smaller 64 MiB VMEM as well)."""
    if M % 128 != 0:
        return M     # small / ragged M: one tile per batch
        # TODO(synk): pad M to a multiple of 128 for large ragged centroid counts.
    budget = 16 * 1024 * 1024                 # ~6 live (N, TM) f32 buffers
    for cand in (1024, 512, 256, 128):
        if M % cand == 0 and 6 * 4 * N * cand <= budget:
            return cand
    return 128


def ball_query_and_group(xyz, new_xyz, feats=None, *, radius, neighbour):
    """Pallas forward of basicBallQueryPointGrouping (use_xyz=True)."""
    B, N, _ = xyz.shape
    _, M, _ = new_xyz.shape
    pts = xyz if feats is None else jnp.concatenate([xyz, feats], axis=-1)
    D = pts.shape[-1]
    C = D - 3
    K = neighbour
    out_dtype = pts.dtype

    ptsT = jnp.swapaxes(pts, 1, 2)       # (B, D, N) channel-first point table
    cenT = jnp.swapaxes(new_xyz, 1, 2)   # (B, 3, M) channel-first centroids

    TM = _choose_tile_m(M, N)
    grid = (B, M // TM)

    kernel = functools.partial(_ball_group_kernel,
                               r2=float(radius) ** 2, K=K, C=C)
    out = pl.pallas_call(
        kernel,
        grid=grid,
        in_specs=[
            pl.BlockSpec((1, N, 3), lambda b, mt: (b, 0, 0)),    # xyz (resident per b)
            pl.BlockSpec((1, 3, TM), lambda b, mt: (b, 0, mt)),  # centroid tile
            pl.BlockSpec((1, D, N), lambda b, mt: (b, 0, 0)),    # point table (per b)
        ],
        out_specs=pl.BlockSpec((1, K, D, TM), lambda b, mt: (b, 0, 0, mt)),
        out_shape=jax.ShapeDtypeStruct((B, K, D, M), out_dtype),
        compiler_params=pltpu.CompilerParams(
            dimension_semantics=("parallel", "parallel"),
            vmem_limit_bytes=48 * 1024 * 1024,
        ),
    )(xyz, cenT, ptsT)

    # (B, K, D, M) -> (B, M, K, D): cheap layout fixup outside the kernel.
    return jnp.transpose(out, (0, 3, 1, 2))


def _reference(xyz, new_xyz, feats, radius, K):
    """Loop reference following the pointnet2 ball_query CUDA kernel exactly."""
    xyz = np.asarray(xyz, np.float32)
    new_xyz = np.asarray(new_xyz, np.float32)
    feats = np.asarray(feats, np.float32)
    B, N, _ = xyz.shape
    M = new_xyz.shape[1]
    C = feats.shape[-1]
    r2 = np.float32(radius) * np.float32(radius)
    out = np.zeros((B, M, K, 3 + C), np.float32)
    for b in range(B):
        for m in range(M):
            c = new_xyz[b, m]
            d2 = np.zeros((N,), np.float32)
            for j in range(3):
                diff = c[j] - xyz[b, :, j]
                d2 = d2 + diff * diff
            idx = np.zeros((K,), np.int64)
            cnt = 0
            for n in range(N):
                if d2[n] < r2:
                    if cnt == 0:
                        idx[:] = n
                    idx[cnt] = n
                    cnt += 1
                    if cnt >= K:
                        break
            g_xyz = xyz[b, idx] - c[None, :]
            g_feat = feats[b, idx]
            out[b, m] = np.concatenate([g_xyz, g_feat], axis=-1)
    return out


if __name__ == "__main__":
    B, N, M, C, K = 2, 64, 16, 4, 8
    radius = 0.35

    key = jax.random.PRNGKey(0)
    k_xyz, k_feat = jax.random.split(key, 2)
    xyz = jax.random.uniform(k_xyz, (B, N, 3), dtype=jnp.float32)
    new_xyz = xyz[:, :M, :]                      # centroids = first M points (FPS-like)
    feats = jax.random.normal(k_feat, (B, N, C), dtype=jnp.float32)

    out = ball_query_and_group(xyz, new_xyz, feats, radius=radius, neighbour=K)
    out = jax.block_until_ready(out)

    ref = _reference(xyz, new_xyz, feats, radius, K)
    assert out.shape == (B, M, K, 3 + C), out.shape
    assert np.allclose(np.asarray(out), ref, atol=1e-4), "mismatch vs reference"

    print("KERNEL_OK")
</pallas_src>

<mosaic_0001>
module attributes {stable_mosaic.version = 11 : i64} {
  func.func @_ball_group_kernel(%arg0: i32, %arg1: i32, %arg2: memref<1x64x3xf32, #tpu.memory_space<vmem>>, %arg3: memref<1x3x16xf32, #tpu.memory_space<vmem>>, %arg4: memref<1x7x64xf32, #tpu.memory_space<vmem>>, %arg5: memref<1x8x7x16xf32, #tpu.memory_space<vmem>>) attributes {dimension_semantics = [#tpu.dimension_semantics<parallel>, #tpu.dimension_semantics<parallel>], iteration_bounds = array<i64: 2, 1>, scalar_prefetch = 0 : i64, scratch_operands = 0 : i64, tpu.core_type = #tpu.core_type<tc>, window_params = [{transform_indices = @transform_0, window_bounds = array<i64: 1, 64, 3>}, {transform_indices = @transform_1, window_bounds = array<i64: 1, 3, 16>}, {transform_indices = @transform_2, window_bounds = array<i64: 1, 7, 64>}, {transform_indices = @transform_3, window_bounds = array<i64: 1, 8, 7, 16>}]} {
    %c0 = arith.constant 0 : index
    %c0_0 = arith.constant 0 : index
    %c0_1 = arith.constant 0 : index
    %0 = vector.load %arg2[%c0, %c0_0, %c0_1] : memref<1x64x3xf32, #tpu.memory_space<vmem>>, vector<1x64x3xf32>
    %1 = vector.shape_cast %0 : vector<1x64x3xf32> to vector<64x3xf32>
    %c0_2 = arith.constant 0 : index
    %c0_3 = arith.constant 0 : index
    %c0_4 = arith.constant 0 : index
    %2 = vector.load %arg3[%c0_2, %c0_3, %c0_4] : memref<1x3x16xf32, #tpu.memory_space<vmem>>, vector<1x3x16xf32>
    %3 = vector.shape_cast %2 : vector<1x3x16xf32> to vector<3x16xf32>
    %c0_5 = arith.constant 0 : index
    %c0_6 = arith.constant 0 : index
    %c0_7 = arith.constant 0 : index
    %4 = vector.load %arg4[%c0_5, %c0_6, %c0_7] : memref<1x7x64xf32, #tpu.memory_space<vmem>>, vector<1x7x64xf32>
    %5 = vector.shape_cast %4 : vector<1x7x64xf32> to vector<7x64xf32>
    %cst = arith.constant 0.000000e+00 : f32
    %6 = vector.broadcast %cst : f32 to vector<64x16xf32>
    %7 = vector.extract_strided_slice %1 {offsets = [0, 0], sizes = [64, 1], strides = [1, 1]} : vector<64x3xf32> to vector<64x1xf32>
    %8 = vector.extract_strided_slice %3 {offsets = [0, 0], sizes = [1, 16], strides = [1, 1]} : vector<3x16xf32> to vector<1x16xf32>
    %9 = vector.broadcast %7 : vector<64x1xf32> to vector<64x16xf32>
    %10 = vector.broadcast %8 : vector<1x16xf32> to vector<64x16xf32>
    %11 = arith.subf %9, %10 : vector<64x16xf32>
    %12 = arith.mulf %11, %11 : vector<64x16xf32>
    %13 = arith.addf %6, %12 : vector<64x16xf32>
    %14 = vector.extract_strided_slice %1 {offsets = [0, 1], sizes = [64, 1], strides = [1, 1]} : vector<64x3xf32> to vector<64x1xf32>
    %15 = vector.extract_strided_slice %3 {offsets = [1, 0], sizes = [1, 16], strides = [1, 1]} : vector<3x16xf32> to vector<1x16xf32>
    %16 = vector.broadcast %14 : vector<64x1xf32> to vector<64x16xf32>
    %17 = vector.broadcast %15 : vector<1x16xf32> to vector<64x16xf32>
    %18 = arith.subf %16, %17 : vector<64x16xf32>
    %19 = arith.mulf %18, %18 : vector<64x16xf32>
    %20 = arith.addf %13, %19 : vector<64x16xf32>
    %21 = vector.extract_strided_slice %1 {offsets = [0, 2], sizes = [64, 1], strides = [1, 1]} : vector<64x3xf32> to vector<64x1xf32>
    %22 = vector.extract_strided_slice %3 {offsets = [2, 0], sizes = [1, 16], strides = [1, 1]} : vector<3x16xf32> to vector<1x16xf32>
    %23 = vector.broadcast %21 : vector<64x1xf32> to vector<64x16xf32>
    %24 = vector.broadcast %22 : vector<1x16xf32> to vector<64x16xf32>
    %25 = arith.subf %23, %24 : vector<64x16xf32>
    %26 = arith.mulf %25, %25 : vector<64x16xf32>
    %27 = arith.addf %20, %26 : vector<64x16xf32>
    %cst_8 = arith.constant 1.225000e-01 : f32
    %28 = vector.broadcast %cst_8 : f32 to vector<64x16xf32>
    %29 = arith.cmpf olt, %27, %28 : vector<64x16xf32>
    %30 = arith.extui %29 : vector<64x16xi1> to vector<64x16xi32>
    %c0_i32 = arith.constant 0 : i32
    %31 = vector.broadcast %c0_i32 : i32 to vector<1x16xi32>
    %32 = vector.extract_strided_slice %30 {offsets = [0, 0], sizes = [63, 16], strides = [1, 1]} : vector<64x16xi32> to vector<63x16xi32>
    %33 = tpu.concatenate %31, %32 in 0 : vector<1x16xi32>, vector<63x16xi32> -> vector<64x16xi32>
    %34 = arith.addi %30, %33 : vector<64x16xi32>
    %c0_i32_9 = arith.constant 0 : i32
    %35 = vector.broadcast %c0_i32_9 : i32 to vector<2x16xi32>
    %36 = vector.extract_strided_slice %34 {offsets = [0, 0], sizes = [62, 16], strides = [1, 1]} : vector<64x16xi32> to vector<62x16xi32>
    %37 = tpu.concatenate %35, %36 in 0 : vector<2x16xi32>, vector<62x16xi32> -> vector<64x16xi32>
    %38 = arith.addi %34, %37 : vector<64x16xi32>
    %c0_i32_10 = arith.constant 0 : i32
    %39 = vector.broadcast %c0_i32_10 : i32 to vector<4x16xi32>
    %40 = vector.extract_strided_slice %38 {offsets = [0, 0], sizes = [60, 16], strides = [1, 1]} : vector<64x16xi32> to vector<60x16xi32>
    %41 = tpu.concatenate %39, %40 in 0 : vector<4x16xi32>, vector<60x16xi32> -> vector<64x16xi32>
    %42 = arith.addi %38, %41 : vector<64x16xi32>
    %c0_i32_11 = arith.constant 0 : i32
    %43 = vector.broadcast %c0_i32_11 : i32 to vector<8x16xi32>
    %44 = vector.extract_strided_slice %42 {offsets = [0, 0], sizes = [56, 16], strides = [1, 1]} : vector<64x16xi32> to vector<56x16xi32>
    %45 = tpu.concatenate %43, %44 in 0 : vector<8x16xi32>, vector<56x16xi32> -> vector<64x16xi32>
    %46 = arith.addi %42, %45 : vector<64x16xi32>
    %c0_i32_12 = arith.constant 0 : i32
    %47 = vector.broadcast %c0_i32_12 : i32 to vector<16x16xi32>
    %48 = vector.extract_strided_slice %46 {offsets = [0, 0], sizes = [48, 16], strides = [1, 1]} : vector<64x16xi32> to vector<48x16xi32>
    %49 = tpu.concatenate %47, %48 in 0 : vector<16x16xi32>, vector<48x16xi32> -> vector<64x16xi32>
    %50 = arith.addi %46, %49 : vector<64x16xi32>
    %c0_i32_13 = arith.constant 0 : i32
    %51 = vector.broadcast %c0_i32_13 : i32 to vector<32x16xi32>
    %52 = vector.extract_strided_slice %50 {offsets = [0, 0], sizes = [32, 16], strides = [1, 1]} : vector<64x16xi32> to vector<32x16xi32>
    %53 = tpu.concatenate %51, %52 in 0 : vector<32x16xi32>, vector<32x16xi32> -> vector<64x16xi32>
    %54 = arith.addi %50, %53 : vector<64x16xi32>
    %55 = vector.extract_strided_slice %54 {offsets = [63, 0], sizes = [1, 16], strides = [1, 1]} : vector<64x16xi32> to vector<1x16xi32>
    %56 = tpu.iota {dimensions = array<i32: 0>} : vector<64x1xi32>
    %c0_i32_14 = arith.constant 0 : i32
    %57 = vector.broadcast %c0_i32_14 : i32 to vector<64x1xi32>
    %58 = arith.cmpi eq, %56, %57 : vector<64x1xi32>
    %c0_i32_15 = arith.constant 0 : i32
    %59 = vector.broadcast %c0_i32_15 : i32 to vector<1x16xi32>
    %60 = arith.cmpi eq, %55, %59 : vector<1x16xi32>
    %61 = vector.broadcast %60 : vector<1x16xi1> to vector<64x16xi1>
    %62 = vector.broadcast %58 : vector<64x1xi1> to vector<64x16xi1>
    %63 = arith.andi %61, %62 : vector<64x16xi1>
    %c1_i32 = arith.constant 1 : i32
    %64 = vector.broadcast %c1_i32 : i32 to vector<64x16xi32>
    %65 = arith.cmpi eq, %54, %64 : vector<64x16xi32>
    %66 = arith.andi %29, %65 : vector<64x16xi1>
    %cst_16 = arith.constant 0.000000e+00 : f32
    %67 = vector.broadcast %cst_16 : f32 to vector<4x16xf32>
    %68 = tpu.concatenate %3, %67 in 0 : vector<3x16xf32>, vector<4x16xf32> -> vector<7x16xf32>
    %69 = arith.truncf %5 : vector<7x64xf32> to vector<7x64xbf16>
    %70 = arith.extf %69 : vector<7x64xbf16> to vector<7x64xf32>
    %71 = arith.subf %5, %70 : vector<7x64xf32>
    %72 = arith.truncf %71 : vector<7x64xf32> to vector<7x64xbf16>
    %c1_i32_17 = arith.constant 1 : i32
    %73 = vector.broadcast %c1_i32_17 : i32 to vector<64x16xi32>
    %74 = arith.cmpi eq, %54, %73 : vector<64x16xi32>
    %75 = arith.andi %29, %74 : vector<64x16xi1>
    %c0_i32_18 = arith.constant 0 : i32
    %76 = vector.broadcast %c0_i32_18 : i32 to vector<1x16xi32>
    %77 = arith.cmpi sle, %55, %76 : vector<1x16xi32>
    %78 = vector.broadcast %77 : vector<1x16xi1> to vector<64x16xi1>
    %79 = arith.andi %66, %78 : vector<64x16xi1>
    %80 = arith.ori %75, %79 : vector<64x16xi1>
    %81 = arith.ori %80, %63 : vector<64x16xi1>
    %82 = arith.extui %81 : vector<64x16xi1> to vector<64x16xi32>
    %83 = arith.sitofp %82 : vector<64x16xi32> to vector<64x16xf32>
    %84 = arith.truncf %83 : vector<64x16xf32> to vector<64x16xbf16>
    %cst_19 = arith.constant dense<0.000000e+00> : vector<7x16xf32>
    %85 = tpu.matmul %69, %84, %cst_19 {dimension_numbers = #tpu.dot_dimension_numbers<[1], [0], [0], [1], [0, 0, 1, 1], [], []>} : vector<7x64xbf16>, vector<64x16xbf16>, vector<7x16xf32> -> vector<7x16xf32>
    %cst_20 = arith.constant dense<0.000000e+00> : vector<7x16xf32>
    %86 = tpu.matmul %72, %84, %cst_20 {dimension_numbers = #tpu.dot_dimension_numbers<[1], [0], [0], [1], [0, 0, 1, 1], [], []>} : vector<7x64xbf16>, vector<64x16xbf16>, vector<7x16xf32> -> vector<7x16xf32>
    %87 = arith.addf %85, %86 : vector<7x16xf32>
    %88 = arith.subf %87, %68 : vector<7x16xf32>
    %c0_21 = arith.constant 0 : index
    %c0_22 = arith.constant 0 : index
    %c0_23 = arith.constant 0 : index
    %c0_24 = arith.constant 0 : index
    %89 = vector.load %arg5[%c0_21, %c0_22, %c0_23, %c0_24] : memref<1x8x7x16xf32, #tpu.memory_space<vmem>>, vector<1x1x7x16xf32>
    %90 = vector.shape_cast %89 : vector<1x1x7x16xf32> to vector<7x16xf32>
    %91 = vector.shape_cast %88 : vector<7x16xf32> to vector<1x1x7x16xf32>
    tpu.vector_store %arg5[%c0_21, %c0_22, %c0_23, %c0_24], %91 {strides = array<i32>} : memref<1x8x7x16xf32, #tpu.memory_space<vmem>>, vector<1x1x7x16xf32>,
    %c2_i32 = arith.constant 2 : i32
    %92 = vector.broadcast %c2_i32 : i32 to vector<64x16xi32>
    %93 = arith.cmpi eq, %54, %92 : vector<64x16xi32>
    %94 = arith.andi %29, %93 : vector<64x16xi1>
    %c1_i32_25 = arith.constant 1 : i32
    %95 = vector.broadcast %c1_i32_25 : i32 to vector<1x16xi32>
    %96 = arith.cmpi sle, %55, %95 : vector<1x16xi32>
    %97 = vector.broadcast %96 : vector<1x16xi1> to vector<64x16xi1>
    %98 = arith.andi %66, %97 : vector<64x16xi1>
    %99 = arith.ori %94, %98 : vector<64x16xi1>
    %100 = arith.ori %99, %63 : vector<64x16xi1>
    %101 = arith.extui %100 : vector<64x16xi1> to vector<64x16xi32>
    %102 = arith.sitofp %101 : vector<64x16xi32> to vector<64x16xf32>
    %103 = arith.truncf %102 : vector<64x16xf32> to vector<64x16xbf16>
    %cst_26 = arith.constant dense<0.000000e+00> : vector<7x16xf32>
    %104 = tpu.matmul %69, %103, %cst_26 {dimension_numbers = #tpu.dot_dimension_numbers<[1], [0], [0], [1], [0, 0, 1, 1], [], []>} : vector<7x64xbf16>, vector<64x16xbf16>, vector<7x16xf32> -> vector<7x16xf32>
    %cst_27 = arith.constant dense<0.000000e+00> : vector<7x16xf32>
    %105 = tpu.matmul %72, %103, %cst_27 {dimension_numbers = #tpu.dot_dimension_numbers<[1], [0], [0], [1], [0, 0, 1, 1], [], []>} : vector<7x64xbf16>, vector<64x16xbf16>, vector<7x16xf32> -> vector<7x16xf32>
    %106 = arith.addf %104, %105 : vector<7x16xf32>
    %107 = arith.subf %106, %68 : vector<7x16xf32>
    %c0_28 = arith.constant 0 : index
    %c1 = arith.constant 1 : index
    %c0_29 = arith.constant 0 : index
    %c0_30 = arith.constant 0 : index
    %108 = vector.load %arg5[%c0_28, %c1, %c0_29, %c0_30] : memref<1x8x7x16xf32, #tpu.memory_space<vmem>>, vector<1x1x7x16xf32>
    %109 = vector.shape_cast %108 : vector<1x1x7x16xf32> to vector<7x16xf32>
    %110 = vector.shape_cast %107 : vector<7x16xf32> to vector<1x1x7x16xf32>
    tpu.vector_store %arg5[%c0_28, %c1, %c0_29, %c0_30], %110 {strides = array<i32>} : memref<1x8x7x16xf32, #tpu.memory_space<vmem>>, vector<1x1x7x16xf32>,
    %c3_i32 = arith.constant 3 : i32
    %111 = vector.broadcast %c3_i32 : i32 to vector<64x16xi32>
    %112 = arith.cmpi eq, %54, %111 : vector<64x16xi32>
    %113 = arith.andi %29, %112 : vector<64x16xi1>
    %c2_i32_31 = arith.constant 2 : i32
    %114 = vector.broadcast %c2_i32_31 : i32 to vector<1x16xi32>
    %115 = arith.cmpi sle, %55, %114 : vector<1x16xi32>
    %116 = vector.broadcast %115 : vector<1x16xi1> to vector<64x16xi1>
    %117 = arith.andi %66, %116 : vector<64x16xi1>
    %118 = arith.ori %113, %117 : vector<64x16xi1>
    %119 = arith.ori %118, %63 : vector<64x16xi1>
    %120 = arith.extui %119 : vector<64x16xi1> to vector<64x16xi32>
    %121 = arith.sitofp %120 : vector<64x16xi32> to vector<64x16xf32>
    %122 = arith.truncf %121 : vector<64x16xf32> to vector<64x16xbf16>
    %cst_32 = arith.constant dense<0.000000e+00> : vector<7x16xf32>
    %123 = tpu.matmul %69, %122, %cst_32 {dimension_numbers = #tpu.dot_dimension_numbers<[1], [0], [0], [1], [0, 0, 1, 1], [], []>} : vector<7x64xbf16>, vector<64x16xbf16>, vector<7x16xf32> -> vector<7x16xf32>
    %cst_33 = arith.constant dense<0.000000e+00> : vector<7x16xf32>
    %124 = tpu.matmul %72, %122, %cst_33 {dimension_numbers = #tpu.dot_dimension_numbers<[1], [0], [0], [1], [0, 0, 1, 1], [], []>} : vector<7x64xbf16>, vector<64x16xbf16>, vector<7x16xf32> -> vector<7x16xf32>
    %125 = arith.addf %123, %124 : vector<7x16xf32>
    %126 = arith.subf %125, %68 : vector<7x16xf32>
    %c0_34 = arith.constant 0 : index
    %c2 = arith.constant 2 : index
    %c0_35 = arith.constant 0 : index
    %c0_36 = arith.constant 0 : index
    %127 = vector.load %arg5[%c0_34, %c2, %c0_35, %c0_36] : memref<1x8x7x16xf32, #tpu.memory_space<vmem>>, vector<1x1x7x16xf32>
    %128 = vector.shape_cast %127 : vector<1x1x7x16xf32> to vector<7x16xf32>
    %129 = vector.shape_cast %126 : vector<7x16xf32> to vector<1x1x7x16xf32>
    tpu.vector_store %arg5[%c0_34, %c2, %c0_35, %c0_36], %129 {strides = array<i32>} : memref<1x8x7x16xf32, #tpu.memory_space<vmem>>, vector<1x1x7x16xf32>,
    %c4_i32 = arith.constant 4 : i32
    %130 = vector.broadcast %c4_i32 : i32 to vector<64x16xi32>
    %131 = arith.cmpi eq, %54, %130 : vector<64x16xi32>
    %132 = arith.andi %29, %131 : vector<64x16xi1>
    %c3_i32_37 = arith.constant 3 : i32
    %133 = vector.broadcast %c3_i32_37 : i32 to vector<1x16xi32>
    %134 = arith.cmpi sle, %55, %133 : vector<1x16xi32>
    %135 = vector.broadcast %134 : vector<1x16xi1> to vector<64x16xi1>
    %136 = arith.andi %66, %135 : vector<64x16xi1>
    %137 = arith.ori %132, %136 : vector<64x16xi1>
    %138 = arith.ori %137, %63 : vector<64x16xi1>
    %139 = arith.extui %138 : vector<64x16xi1> to vector<64x16xi32>
    %140 = arith.sitofp %139 : vector<64x16xi32> to vector<64x16xf32>
    %141 = arith.truncf %140 : vector<64x16xf32> to vector<64x16xbf16>
    %cst_38 = arith.constant dense<0.000000e+00> : vector<7x16xf32>
    %142 = tpu.matmul %69, %141, %cst_38 {dimension_numbers = #tpu.dot_dimension_numbers<[1], [0], [0], [1], [0, 0, 1, 1], [], []>} : vector<7x64xbf16>, vector<64x16xbf16>, vector<7x16xf32> -> vector<7x16xf32>
    %cst_39 = arith.constant dense<0.000000e+00> : vector<7x16xf32>
    %143 = tpu.matmul %72, %141, %cst_39 {dimension_numbers = #tpu.dot_dimension_numbers<[1], [0], [0], [1], [0, 0, 1, 1], [], []>} : vector<7x64xbf16>, vector<64x16xbf16>, vector<7x16xf32> -> vector<7x16xf32>
    %144 = arith.addf %142, %143 : vector<7x16xf32>
    %145 = arith.subf %144, %68 : vector<7x16xf32>
    %c0_40 = arith.constant 0 : index
    %c3 = arith.constant 3 : index
    %c0_41 = arith.constant 0 : index
    %c0_42 = arith.constant 0 : index
    %146 = vector.load %arg5[%c0_40, %c3, %c0_41, %c0_42] : memref<1x8x7x16xf32, #tpu.memory_space<vmem>>, vector<1x1x7x16xf32>
    %147 = vector.shape_cast %146 : vector<1x1x7x16xf32> to vector<7x16xf32>
    %148 = vector.shape_cast %145 : vector<7x16xf32> to vector<1x1x7x16xf32>
    tpu.vector_store %arg5[%c0_40, %c3, %c0_41, %c0_42], %148 {strides = array<i32>} : memref<1x8x7x16xf32, #tpu.memory_space<vmem>>, vector<1x1x7x16xf32>,
    %c5_i32 = arith.constant 5 : i32
    %149 = vector.broadcast %c5_i32 : i32 to vector<64x16xi32>
    %150 = arith.cmpi eq, %54, %149 : vector<64x16xi32>
    %151 = arith.andi %29, %150 : vector<64x16xi1>
    %c4_i32_43 = arith.constant 4 : i32
    %152 = vector.broadcast %c4_i32_43 : i32 to vector<1x16xi32>
    %153 = arith.cmpi sle, %55, %152 : vector<1x16xi32>
    %154 = vector.broadcast %153 : vector<1x16xi1> to vector<64x16xi1>
    %155 = arith.andi %66, %154 : vector<64x16xi1>
    %156 = arith.ori %151, %155 : vector<64x16xi1>
    %157 = arith.ori %156, %63 : vector<64x16xi1>
    %158 = arith.extui %157 : vector<64x16xi1> to vector<64x16xi32>
    %159 = arith.sitofp %158 : vector<64x16xi32> to vector<64x16xf32>
    %160 = arith.truncf %159 : vector<64x16xf32> to vector<64x16xbf16>
    %cst_44 = arith.constant dense<0.000000e+00> : vector<7x16xf32>
    %161 = tpu.matmul %69, %160, %cst_44 {dimension_numbers = #tpu.dot_dimension_numbers<[1], [0], [0], [1], [0, 0, 1, 1], [], []>} : vector<7x64xbf16>, vector<64x16xbf16>, vector<7x16xf32> -> vector<7x16xf32>
    %cst_45 = arith.constant dense<0.000000e+00> : vector<7x16xf32>
    %162 = tpu.matmul %72, %160, %cst_45 {dimension_numbers = #tpu.dot_dimension_numbers<[1], [0], [0], [1], [0, 0, 1, 1], [], []>} : vector<7x64xbf16>, vector<64x16xbf16>, vector<7x16xf32> -> vector<7x16xf32>
    %163 = arith.addf %161, %162 : vector<7x16xf32>
    %164 = arith.subf %163, %68 : vector<7x16xf32>
    %c0_46 = arith.constant 0 : index
    %c4 = arith.constant 4 : index
    %c0_47 = arith.constant 0 : index
    %c0_48 = arith.constant 0 : index
    %165 = vector.load %arg5[%c0_46, %c4, %c0_47, %c0_48] : memref<1x8x7x16xf32, #tpu.memory_space<vmem>>, vector<1x1x7x16xf32>
    %166 = vector.shape_cast %165 : vector<1x1x7x16xf32> to vector<7x16xf32>
    %167 = vector.shape_cast %164 : vector<7x16xf32> to vector<1x1x7x16xf32>
    tpu.vector_store %arg5[%c0_46, %c4, %c0_47, %c0_48], %167 {strides = array<i32>} : memref<1x8x7x16xf32, #tpu.memory_space<vmem>>, vector<1x1x7x16xf32>,
    %c6_i32 = arith.constant 6 : i32
    %168 = vector.broadcast %c6_i32 : i32 to vector<64x16xi32>
    %169 = arith.cmpi eq, %54, %168 : vector<64x16xi32>
    %170 = arith.andi %29, %169 : vector<64x16xi1>
    %c5_i32_49 = arith.constant 5 : i32
    %171 = vector.broadcast %c5_i32_49 : i32 to vector<1x16xi32>
    %172 = arith.cmpi sle, %55, %171 : vector<1x16xi32>
    %173 = vector.broadcast %172 : vector<1x16xi1> to vector<64x16xi1>
    %174 = arith.andi %66, %173 : vector<64x16xi1>
    %175 = arith.ori %170, %174 : vector<64x16xi1>
    %176 = arith.ori %175, %63 : vector<64x16xi1>
    %177 = arith.extui %176 : vector<64x16xi1> to vector<64x16xi32>
    %178 = arith.sitofp %177 : vector<64x16xi32> to vector<64x16xf32>
    %179 = arith.truncf %178 : vector<64x16xf32> to vector<64x16xbf16>
    %cst_50 = arith.constant dense<0.000000e+00> : vector<7x16xf32>
    %180 = tpu.matmul %69, %179, %cst_50 {dimension_numbers = #tpu.dot_dimension_numbers<[1], [0], [0], [1], [0, 0, 1, 1], [], []>} : vector<7x64xbf16>, vector<64x16xbf16>, vector<7x16xf32> -> vector<7x16xf32>
    %cst_51 = arith.constant dense<0.000000e+00> : vector<7x16xf32>
    %181 = tpu.matmul %72, %179, %cst_51 {dimension_numbers = #tpu.dot_dimension_numbers<[1], [0], [0], [1], [0, 0, 1, 1], [], []>} : vector<7x64xbf16>, vector<64x16xbf16>, vector<7x16xf32> -> vector<7x16xf32>
    %182 = arith.addf %180, %181 : vector<7x16xf32>
    %183 = arith.subf %182, %68 : vector<7x16xf32>
    %c0_52 = arith.constant 0 : index
    %c5 = arith.constant 5 : index
    %c0_53 = arith.constant 0 : index
    %c0_54 = arith.constant 0 : index
    %184 = vector.load %arg5[%c0_52, %c5, %c0_53, %c0_54] : memref<1x8x7x16xf32, #tpu.memory_space<vmem>>, vector<1x1x7x16xf32>
    %185 = vector.shape_cast %184 : vector<1x1x7x16xf32> to vector<7x16xf32>
    %186 = vector.shape_cast %183 : vector<7x16xf32> to vector<1x1x7x16xf32>
    tpu.vector_store %arg5[%c0_52, %c5, %c0_53, %c0_54], %186 {strides = array<i32>} : memref<1x8x7x16xf32, #tpu.memory_space<vmem>>, vector<1x1x7x16xf32>,
    %c7_i32 = arith.constant 7 : i32
    %187 = vector.broadcast %c7_i32 : i32 to vector<64x16xi32>
    %188 = arith.cmpi eq, %54, %187 : vector<64x16xi32>
    %189 = arith.andi %29, %188 : vector<64x16xi1>
    %c6_i32_55 = arith.constant 6 : i32
    %190 = vector.broadcast %c6_i32_55 : i32 to vector<1x16xi32>
    %191 = arith.cmpi sle, %55, %190 : vector<1x16xi32>
    %192 = vector.broadcast %191 : vector<1x16xi1> to vector<64x16xi1>
    %193 = arith.andi %66, %192 : vector<64x16xi1>
    %194 = arith.ori %189, %193 : vector<64x16xi1>
    %195 = arith.ori %194, %63 : vector<64x16xi1>
    %196 = arith.extui %195 : vector<64x16xi1> to vector<64x16xi32>
    %197 = arith.sitofp %196 : vector<64x16xi32> to vector<64x16xf32>
    %198 = arith.truncf %197 : vector<64x16xf32> to vector<64x16xbf16>
    %cst_56 = arith.constant dense<0.000000e+00> : vector<7x16xf32>
    %199 = tpu.matmul %69, %198, %cst_56 {dimension_numbers = #tpu.dot_dimension_numbers<[1], [0], [0], [1], [0, 0, 1, 1], [], []>} : vector<7x64xbf16>, vector<64x16xbf16>, vector<7x16xf32> -> vector<7x16xf32>
    %cst_57 = arith.constant dense<0.000000e+00> : vector<7x16xf32>
    %200 = tpu.matmul %72, %198, %cst_57 {dimension_numbers = #tpu.dot_dimension_numbers<[1], [0], [0], [1], [0, 0, 1, 1], [], []>} : vector<7x64xbf16>, vector<64x16xbf16>, vector<7x16xf32> -> vector<7x16xf32>
    %201 = arith.addf %199, %200 : vector<7x16xf32>
    %202 = arith.subf %201, %68 : vector<7x16xf32>
    %c0_58 = arith.constant 0 : index
    %c6 = arith.constant 6 : index
    %c0_59 = arith.constant 0 : index
    %c0_60 = arith.constant 0 : index
    %203 = vector.load %arg5[%c0_58, %c6, %c0_59, %c0_60] : memref<1x8x7x16xf32, #tpu.memory_space<vmem>>, vector<1x1x7x16xf32>
    %204 = vector.shape_cast %203 : vector<1x1x7x16xf32> to vector<7x16xf32>
    %205 = vector.shape_cast %202 : vector<7x16xf32> to vector<1x1x7x16xf32>
    tpu.vector_store %arg5[%c0_58, %c6, %c0_59, %c0_60], %205 {strides = array<i32>} : memref<1x8x7x16xf32, #tpu.memory_space<vmem>>, vector<1x1x7x16xf32>,
    %c8_i32 = arith.constant 8 : i32
    %206 = vector.broadcast %c8_i32 : i32 to vector<64x16xi32>
    %207 = arith.cmpi eq, %54, %206 : vector<64x16xi32>
    %208 = arith.andi %29, %207 : vector<64x16xi1>
    %c7_i32_61 = arith.constant 7 : i32
    %209 = vector.broadcast %c7_i32_61 : i32 to vector<1x16xi32>
    %210 = arith.cmpi sle, %55, %209 : vector<1x16xi32>
    %211 = vector.broadcast %210 : vector<1x16xi1> to vector<64x16xi1>
    %212 = arith.andi %66, %211 : vector<64x16xi1>
    %213 = arith.ori %208, %212 : vector<64x16xi1>
    %214 = arith.ori %213, %63 : vector<64x16xi1>
    %215 = arith.extui %214 : vector<64x16xi1> to vector<64x16xi32>
    %216 = arith.sitofp %215 : vector<64x16xi32> to vector<64x16xf32>
    %217 = arith.truncf %216 : vector<64x16xf32> to vector<64x16xbf16>
    %cst_62 = arith.constant dense<0.000000e+00> : vector<7x16xf32>
    %218 = tpu.matmul %69, %217, %cst_62 {dimension_numbers = #tpu.dot_dimension_numbers<[1], [0], [0], [1], [0, 0, 1, 1], [], []>} : vector<7x64xbf16>, vector<64x16xbf16>, vector<7x16xf32> -> vector<7x16xf32>
    %cst_63 = arith.constant dense<0.000000e+00> : vector<7x16xf32>
    %219 = tpu.matmul %72, %217, %cst_63 {dimension_numbers = #tpu.dot_dimension_numbers<[1], [0], [0], [1], [0, 0, 1, 1], [], []>} : vector<7x64xbf16>, vector<64x16xbf16>, vector<7x16xf32> -> vector<7x16xf32>
    %220 = arith.addf %218, %219 : vector<7x16xf32>
    %221 = arith.subf %220, %68 : vector<7x16xf32>
    %c0_64 = arith.constant 0 : index
    %c7 = arith.constant 7 : index
    %c0_65 = arith.constant 0 : index
    %c0_66 = arith.constant 0 : index
    %222 = vector.load %arg5[%c0_64, %c7, %c0_65, %c0_66] : memref<1x8x7x16xf32, #tpu.memory_space<vmem>>, vector<1x1x7x16xf32>
    %223 = vector.shape_cast %222 : vector<1x1x7x16xf32> to vector<7x16xf32>
    %224 = vector.shape_cast %221 : vector<7x16xf32> to vector<1x1x7x16xf32>
    tpu.vector_store %arg5[%c0_64, %c7, %c0_65, %c0_66], %224 {strides = array<i32>} : memref<1x8x7x16xf32, #tpu.memory_space<vmem>>, vector<1x1x7x16xf32>,
    return
  }
  func.func @transform_0(%arg0: i32, %arg1: i32) -> (i32, i32, i32) {
    %c0_i32 = arith.constant 0 : i32
    %c0_i32_0 = arith.constant 0 : i32
    %c0_i32_1 = arith.constant 0 : i32
    return %arg0, %c0_i32, %c0_i32_0 : i32, i32, i32
  }
  func.func @transform_1(%arg0: i32, %arg1: i32) -> (i32, i32, i32) {
    %c0_i32 = arith.constant 0 : i32
    %c0_i32_0 = arith.constant 0 : i32
    return %arg0, %c0_i32, %arg1 : i32, i32, i32
  }
  func.func @transform_2(%arg0: i32, %arg1: i32) -> (i32, i32, i32) {
    %c0_i32 = arith.constant 0 : i32
    %c0_i32_0 = arith.constant 0 : i32
    %c0_i32_1 = arith.constant 0 : i32
    return %arg0, %c0_i32, %c0_i32_0 : i32, i32, i32
  }
  func.func @transform_3(%arg0: i32, %arg1: i32) -> (i32, i32, i32, i32) {
    %c0_i32 = arith.constant 0 : i32
    %c0_i32_0 = arith.constant 0 : i32
    %c0_i32_1 = arith.constant 0 : i32
    return %arg0, %c0_i32, %c0_i32_0, %arg1 : i32, i32, i32, i32
  }
}

</mosaic_0001>

<llo_original>
// kernel: tpu_custom_call.1
$region0: #{tpu_custom_call.1}
  #allocation0 [shape = 'u32[]', space=smem, size = 0x4, offset = 0x4, fixed_abs, tag = 'smem constant byte address 0x4 - core index']
  #allocation1 [shape = 'u32[144,128]{1,0:T(1,128)}', space=vmem, size = 0x12000, scoped, tag = 'internal scratch']
  %s0 = inlined_call_operand.vmem [shape: f32[2,64,3], index: 0, kind: input, shape index: {}]
  %s1 = inlined_call_operand.vmem [shape: f32[2,3,16], index: 1, kind: input, shape index: {}]
  %s2 = inlined_call_operand.vmem [shape: f32[2,7,64], index: 2, kind: input, shape index: {}]
  %s3 = inlined_call_operand.vmem [shape: f32[2,8,7,16], index: 3, kind: output, shape index: {}]
  %s4 = sld [smem:[#allocation0]]
  $region45: #{tpu_custom_call.1} parent=0
    _
  %s6 = ssub.s32 1, %s4
  %s7 = scalar_select 0, %s6, %s4
  loop: start=0, step=1, limit=4
  $region2: #{tpu_custom_call.1} parent=0 // loop_pre_header
    _
  $region3: #{tpu_custom_call.1} parent=0 // loop_header
    %s9 = sphi 0, %s13
    %p10 = scmp.ge.s32.totalorder %s9, 4
    %s16 = sphi 0, %s28
    %s17 = sphi 0, %s24
    %s18 = sphi 0, %s16
    %s19 = sphi 0, %s17
    %s20 = sphi 0, %s18
    %s21 = sphi 0, %s19
    %s31 = sphi 0, %s33
    %s34 = sphi 0, %s31
    %s35 = sphi 0, %s34
    %s51 = sphi 0, %s35
    %s59 = sphi 0, %s61
    %s62 = sphi 0, %s59
    %s63 = sphi 0, %s62
    %s79 = sphi 0, %s63
    %s85 = sphi 0, %s87
    %s88 = sphi 0, %s85
    %s89 = sphi 0, %s88
    %s105 = sphi 0, %s89
    %s113 = sphi 0, %s115
    %s116 = sphi 0, %s113
    %s117 = sphi 0, %s116
    %s133 = sphi 0, %s117
  $region4: #{tpu_custom_call.1} parent=0 // loop_header_branch
    %12 = sbr.rel (%p10) target = $region8
  $region5: #{tpu_custom_call.1} parent=0 // loop_body
    %s14 = ssub.s32 %s9, 1
    %s15 = ssub.s32 %s9, 2
    %s22 = sadd.s32 1, %s17
    %p23 = scmp.ge.s32.totalorder %s22, 1
    %s24 = scalar_select %p23, 0, %s22
    %s25 = sadd.s32 1, %s16
    %s26 = scalar_select %p23, %s25, %s16
    %p27 = scmp.ge.s32.totalorder %s26, 2
    %s28 = scalar_select %p27, 0, %s26
    %s29 = ssub.s32 %s16, %s28
    %p30 = scmp.eq.s32.totalorder %s29, 0
    %s32 = sadd.s32 %s31, 1
    %s33 = scalar_select %p30, %s31, %s32
    %p36 = pneg %p30
    %p37 = scmp.eq.s32.totalorder %s9, 1
    %p38 = por %p36, %p37
    %p39 = scmp.ne.s32.totalorder %s31, %s34
    %p40 = scmp.eq.s32.totalorder %s9, 0
    %p41 = por %p39, %p40
    %p42 = scmp.ne.s32.totalorder %s31, %s34
    %p43 = scmp.eq.s32.totalorder %s14, 1
    %p44 = por %p42, %p43
    %p45 = scmp.ne.s32.totalorder %s34, %s35
    %p46 = scmp.eq.s32.totalorder %s14, 0
    %p47 = por %p45, %p46
    %p48 = scmp.ne.s32.totalorder %s34, %s35
    %p49 = scmp.eq.s32.totalorder %s15, 1
    %p50 = por %p48, %p49
    %p52 = scmp.ne.s32.totalorder %s35, %s51
    %p53 = scmp.eq.s32.totalorder %s15, 0
    %p54 = por %p52, %p53
    %s55 = ssub.s32 %s16, %s28
    %s56 = ssub.s32 %s17, %s24
    %s57 = sor.u32 %s55, %s56
    %p58 = scmp.eq.s32.totalorder %s57, 0
    %s60 = sadd.s32 %s59, 1
    %s61 = scalar_select %p58, %s59, %s60
    %p64 = pneg %p58
    %p65 = scmp.eq.s32.totalorder %s9, 1
    %p66 = por %p64, %p65
    %p67 = scmp.ne.s32.totalorder %s59, %s62
    %p68 = scmp.eq.s32.totalorder %s9, 0
    %p69 = por %p67, %p68
    %p70 = scmp.ne.s32.totalorder %s59, %s62
    %p71 = scmp.eq.s32.totalorder %s14, 1
    %p72 = por %p70, %p71
    %p73 = scmp.ne.s32.totalorder %s62, %s63
    %p74 = scmp.eq.s32.totalorder %s14, 0
    %p75 = por %p73, %p74
    %p76 = scmp.ne.s32.totalorder %s62, %s63
    %p77 = scmp.eq.s32.totalorder %s15, 1
    %p78 = por %p76, %p77
    %p80 = scmp.ne.s32.totalorder %s63, %s79
    %p81 = scmp.eq.s32.totalorder %s15, 0
    %p82 = por %p80, %p81
    %s83 = ssub.s32 %s16, %s28
    %p84 = scmp.eq.s32.totalorder %s83, 0
    %s86 = sadd.s32 %s85, 1
    %s87 = scalar_select %p84, %s85, %s86
    %p90 = pneg %p84
    %p91 = scmp.eq.s32.totalorder %s9, 1
    %p92 = por %p90, %p91
    %p93 = scmp.ne.s32.totalorder %s85, %s88
    %p94 = scmp.eq.s32.totalorder %s9, 0
    %p95 = por %p93, %p94
    %p96 = scmp.ne.s32.totalorder %s85, %s88
    %p97 = scmp.eq.s32.totalorder %s14, 1
    %p98 = por %p96, %p97
    %p99 = scmp.ne.s32.totalorder %s88, %s89
    %p100 = scmp.eq.s32.totalorder %s14, 0
    %p101 = por %p99, %p100
    %p102 = scmp.ne.s32.totalorder %s88, %s89
    %p103 = scmp.eq.s32.totalorder %s15, 1
    %p104 = por %p102, %p103
    %p106 = scmp.ne.s32.totalorder %s89, %s105
    %p107 = scmp.eq.s32.totalorder %s15, 0
    %p108 = por %p106, %p107
    %s109 = ssub.s32 %s16, %s28
    %s110 = ssub.s32 %s17, %s24
    %s111 = sor.u32 %s109, %s110
    %p112 = scmp.eq.s32.totalorder %s111, 0
    %s114 = sadd.s32 %s113, 1
    %s115 = scalar_select %p112, %s113, %s114
    %p118 = pneg %p112
    %p119 = scmp.eq.s32.totalorder %s9, 1
    %p120 = por %p118, %p119
    %p121 = scmp.ne.s32.totalorder %s113, %s116
    %p122 = scmp.eq.s32.totalorder %s9, 0
    %p123 = por %p121, %p122
    %p124 = scmp.ne.s32.totalorder %s113, %s116
    %p125 = scmp.eq.s32.totalorder %s14, 1
    %p126 = por %p124, %p125
    %p127 = scmp.ne.s32.totalorder %s116, %s117
    %p128 = scmp.eq.s32.totalorder %s14, 0
    %p129 = por %p127, %p128
    %p130 = scmp.ne.s32.totalorder %s116, %s117
    %p131 = scmp.eq.s32.totalorder %s15, 1
    %p132 = por %p130, %p131
    %p134 = scmp.ne.s32.totalorder %s117, %s133
    %p135 = scmp.eq.s32.totalorder %s15, 0
    %p136 = por %p134, %p135
    %p137 = scmp.le.s32.totalorder 1, %s9
    %p138 = scmp.lt.s32.totalorder %s9, 3
    %p139 = pnand %p137, %p138
    %p140 = pneg %p139
    // Predicated region
    $region9: #{tpu_custom_call.1} parent=5 // pred_check
      _
    $region10: #{tpu_custom_call.1} parent=5 // pred_check_branch
      %142 = sbr.rel (%p139) target = $region12
    $region11: #{tpu_custom_call.1} parent=5 // pred_region
      %s143 = ssub.s32 %s9, 1
    $region12: #{tpu_custom_call.1} parent=5 // pred_fallthru
      _
    %p144 = scmp.lt.s32.totalorder %s9, 2
    // Predicated region
    $region13: #{tpu_custom_call.1} parent=5 // pred_check
      %p145 = pneg %p144
    $region14: #{tpu_custom_call.1} parent=5 // pred_check_branch
      %147 = sbr.rel (%p145) target = $region16
    $region15: #{tpu_custom_call.1} parent=5 // pred_region
      // Predicated region
      $region17: #{tpu_custom_call.1} parent=15 // pred_check
        %p148 = pneg %p41
      $region18: #{tpu_custom_call.1} parent=15 // pred_check_branch
        %150 = sbr.rel (%p148) target = $region20
      $region19: #{tpu_custom_call.1} parent=15 // pred_region
        %p151 = scmp.lt.s32.totalorder %s16, 1
        %s152 = scalar_select %p151, %s16, 1
        %s153 = smul.addr %s152, 8
        %s154 = smul.addr %s153, 8
        %s155 = scalar_lea.vmem %s0, %s154
      $region20: #{tpu_custom_call.1} parent=15 // pred_fallthru
        _
      // Predicated region
      $region21: #{tpu_custom_call.1} parent=15 // pred_check
        %p156 = pneg %p69
      $region22: #{tpu_custom_call.1} parent=15 // pred_check_branch
        %158 = sbr.rel (%p156) target = $region24
      $region23: #{tpu_custom_call.1} parent=15 // pred_region
        %p159 = scmp.lt.s32.totalorder %s16, 1
        %s160 = scalar_select %p159, %s16, 1
        %p161 = scmp.lt.s32.totalorder %s17, 0
        %s162 = scalar_select %p161, %s17, 0
        %s163 = sadd.s32 %s162, %s160
        %s164 = smul.addr %s163, 4
        %s165 = scalar_lea.vmem %s1, %s164
      $region24: #{tpu_custom_call.1} parent=15 // pred_fallthru
        _
      // Predicated region
      $region25: #{tpu_custom_call.1} parent=15 // pred_check
        %p166 = pneg %p95
      $region26: #{tpu_custom_call.1} parent=15 // pred_check_branch
        %168 = sbr.rel (%p166) target = $region28
      $region27: #{tpu_custom_call.1} parent=15 // pred_region
        %p169 = scmp.lt.s32.totalorder %s16, 1
        %s170 = scalar_select %p169, %s16, 1
        %s171 = smul.addr %s170, 8
        %s172 = scalar_lea.vmem %s2, %s171
      $region28: #{tpu_custom_call.1} parent=15 // pred_fallthru
        _
    $region16: #{tpu_custom_call.1} parent=5 // pred_fallthru
      _
    %p173 = scmp.le.s32.totalorder 1, %s9
    %p174 = scmp.lt.s32.totalorder %s9, 3
    %p175 = pnand %p173, %p174
    %p176 = pneg %p175
    // Predicated region
    $region29: #{tpu_custom_call.1} parent=5 // pred_check
      _
    $region30: #{tpu_custom_call.1} parent=5 // pred_check_branch
      %178 = sbr.rel (%p175) target = $region32
    $region31: #{tpu_custom_call.1} parent=5 // pred_region
      %s179 = ssub.s32 %s9, 1
      %p180 = scmp.lt.s32.totalorder %s18, 1
      %s181 = scalar_select %p180, %s18, 1
      %s182 = smul.addr %s181, 8
      %s183 = smul.addr %s182, 8
      %s184 = scalar_lea.vmem %s0, %s183
      %p185 = pneg %p47
      %p186 = pneg %p44
      %p187 = scmp.lt.s32.totalorder %s18, 1
      %s188 = scalar_select %p187, %s18, 1
      %p189 = scmp.lt.s32.totalorder %s19, 0
      %s190 = scalar_select %p189, %s19, 0
      %s191 = sadd.s32 %s190, %s188
      %s192 = smul.addr %s191, 4
      %s193 = scalar_lea.vmem %s1, %s192
      %p194 = pneg %p75
      %p195 = pneg %p72
      %p196 = scmp.lt.s32.totalorder %s18, 1
      %s197 = scalar_select %p196, %s18, 1
      %s198 = smul.addr %s197, 8
      %s199 = scalar_lea.vmem %s2, %s198
      %p200 = pneg %p101
      %p201 = pneg %p98
      %p202 = pneg %p129
      %p203 = pneg %p126
      %p204 = scmp.lt.s32.totalorder %s18, 1
      %s205 = scalar_select %p204, %s18, 1
      %p206 = scmp.lt.s32.totalorder %s19, 0
      %s207 = scalar_select %p206, %s19, 0
      %s208 = smul.addr %s205, 8
      %s209 = sadd.s32 %s207, %s208
      %s210 = smul.addr %s209, 8
      %s211 = scalar_lea.vmem %s3, %s210
      %p212 = scmp.lt.s32.totalorder %s18, 1
      %s213 = scalar_select %p212, %s18, 1
      %s214 = smul.addr %s213, 8
      %s215 = smul.addr %s214, 8
      %s216 = scalar_lea.vmem %s0, %s215
      %p217 = scmp.lt.s32.totalorder %s18, 1
      %s218 = scalar_select %p217, %s18, 1
      %p219 = scmp.lt.s32.totalorder %s19, 0
      %s220 = scalar_select %p219, %s19, 0
      %s221 = sadd.s32 %s220, %s218
      %s222 = smul.addr %s221, 4
      %s223 = scalar_lea.vmem %s1, %s222
      %p224 = scmp.lt.s32.totalorder %s18, 1
      %s225 = scalar_select %p224, %s18, 1
      %s226 = smul.addr %s225, 8
      %s227 = scalar_lea.vmem %s2, %s226
      %p228 = scmp.lt.s32.totalorder %s18, 1
      %s229 = scalar_select %p228, %s18, 1
      %p230 = scmp.lt.s32.totalorder %s19, 0
      %s231 = scalar_select %p230, %s19, 0
      %s232 = smul.addr %s229, 8
      %s233 = sadd.s32 %s231, %s232
      %s234 = smul.addr %s233, 8
      %s235 = scalar_lea.vmem %s3, %s234
      %v237 = vld [vmem:[%s216] sm:$0xff]
      %v238 = vld [vmem:[%s216 + $0x8] sm:$0xff]
      %v239 = vld [vmem:[%s216 + $0x10] sm:$0xff]
      %v240 = vld [vmem:[%s216 + $0x18] sm:$0xff]
      %v241 = vld [vmem:[%s216 + $0x20] sm:$0xff]
      %v242 = vld [vmem:[%s216 + $0x28] sm:$0xff]
      %v243 = vld [vmem:[%s216 + $0x30] sm:$0xff]
      %v244 = vld [vmem:[%s216 + $0x38] sm:$0xff]
      %v245 = vld [vmem:[%s223] sm:$0x7]
      %v246 = vld [vmem:[%s227] sm:$0x7f]
      %248 = vset.pattern.permute.xlu0 0
      %249 = vperm.xlu0 %248, %v237
      %v250 = vpop.permute.xlu0 %249
      %253 = vset.pattern.permute.xlu0 0
      %254 = vperm.xlu0 %253, %v238
      %v255 = vpop.permute.xlu0 %254
      %258 = vset.pattern.permute.xlu0 0
      %259 = vperm.xlu0 %258, %v239
      %v260 = vpop.permute.xlu0 %259
      %263 = vset.pattern.permute.xlu0 0
      %264 = vperm.xlu0 %263, %v240
      %v265 = vpop.permute.xlu0 %264
      %268 = vset.pattern.permute.xlu0 0
      %269 = vperm.xlu0 %268, %v241
      %v270 = vpop.permute.xlu0 %269
      %273 = vset.pattern.permute.xlu0 0
      %274 = vperm.xlu0 %273, %v242
      %v275 = vpop.permute.xlu0 %274
      %278 = vset.pattern.permute.xlu0 0
      %279 = vperm.xlu0 %278, %v243
      %v280 = vpop.permute.xlu0 %279
      %283 = vset.pattern.permute.xlu0 0
      %284 = vperm.xlu0 %283, %v244
      %v285 = vpop.permute.xlu0 %284
      %v287 = vlaneseq
      %v288 = vshrl.u32 %v287, 7
      %v289 = vsub.s32 0, %v288
      %v290 = vrot.slane %v245, %v289
      %v291 = vsub.f32 %v250, %v290
      %v292 = vsub.f32 %v255, %v290
      %v293 = vsub.f32 %v260, %v290
      %v294 = vsub.f32 %v265, %v290
      %v295 = vsub.f32 %v270, %v290
      %v296 = vsub.f32 %v275, %v290
      %v297 = vsub.f32 %v280, %v290
      %v298 = vsub.f32 %v285, %v290
      %v299 = vmul.f32 %v291, %v291
      %v300 = vmul.f32 %v292, %v292
      %v301 = vmul.f32 %v293, %v293
      %v302 = vmul.f32 %v294, %v294
      %v303 = vmul.f32 %v295, %v295
      %v304 = vmul.f32 %v296, %v296
      %v305 = vmul.f32 %v297, %v297
      %v306 = vmul.f32 %v298, %v298
      %v307 = vadd.f32 %v299, 0.0
      %v308 = vadd.f32 %v300, 0.0
      %v309 = vadd.f32 %v301, 0.0
      %v310 = vadd.f32 %v302, 0.0
      %v311 = vadd.f32 %v303, 0.0
      %v312 = vadd.f32 %v304, 0.0
      %v313 = vadd.f32 %v305, 0.0
      %v314 = vadd.f32 %v306, 0.0
      %315 = vset.pattern.permute.xlu0 1
      %316 = vperm.xlu0 %315, %v237
      %v317 = vpop.permute.xlu0 %316
      %319 = vset.pattern.permute.xlu0 1
      %320 = vperm.xlu0 %319, %v238
      %v321 = vpop.permute.xlu0 %320
      %323 = vset.pattern.permute.xlu0 1
      %324 = vperm.xlu0 %323, %v239
      %v325 = vpop.permute.xlu0 %324
      %327 = vset.pattern.permute.xlu0 1
      %328 = vperm.xlu0 %327, %v240
      %v329 = vpop.permute.xlu0 %328
      %331 = vset.pattern.permute.xlu0 1
      %332 = vperm.xlu0 %331, %v241
      %v333 = vpop.permute.xlu0 %332
      %335 = vset.pattern.permute.xlu0 1
      %336 = vperm.xlu0 %335, %v242
      %v337 = vpop.permute.xlu0 %336
      %339 = vset.pattern.permute.xlu0 1
      %340 = vperm.xlu0 %339, %v243
      %v341 = vpop.permute.xlu0 %340
      %343 = vset.pattern.permute.xlu0 1
      %344 = vperm.xlu0 %343, %v244
      %v345 = vpop.permute.xlu0 %344
      %v347 = vlaneseq
      %v348 = vshrl.u32 %v347, 7
      %v349 = vsub.s32 1, %v348
      %v350 = vrot.slane %v245, %v349
      %v351 = vsub.f32 %v317, %v350
      %v352 = vsub.f32 %v321, %v350
      %v353 = vsub.f32 %v325, %v350
      %v354 = vsub.f32 %v329, %v350
      %v355 = vsub.f32 %v333, %v350
      %v356 = vsub.f32 %v337, %v350
      %v357 = vsub.f32 %v341, %v350
      %v358 = vsub.f32 %v345, %v350
      %v359 = vmul.f32 %v351, %v351
      %v360 = vmul.f32 %v352, %v352
      %v361 = vmul.f32 %v353, %v353
      %v362 = vmul.f32 %v354, %v354
      %v363 = vmul.f32 %v355, %v355
      %v364 = vmul.f32 %v356, %v356
      %v365 = vmul.f32 %v357, %v357
      %v366 = vmul.f32 %v358, %v358
      %v367 = vadd.f32 %v307, %v359
      %v368 = vadd.f32 %v308, %v360
      %v369 = vadd.f32 %v309, %v361
      %v370 = vadd.f32 %v310, %v362
      %v371 = vadd.f32 %v311, %v363
      %v372 = vadd.f32 %v312, %v364
      %v373 = vadd.f32 %v313, %v365
      %v374 = vadd.f32 %v314, %v366
      %375 = vset.pattern.permute.xlu0 2
      %376 = vperm.xlu0 %375, %v237
      %v377 = vpop.permute.xlu0 %376
      %379 = vset.pattern.permute.xlu0 2
      %380 = vperm.xlu0 %379, %v238
      %v381 = vpop.permute.xlu0 %380
      %383 = vset.pattern.permute.xlu0 2
      %384 = vperm.xlu0 %383, %v239
      %v385 = vpop.permute.xlu0 %384
      %387 = vset.pattern.permute.xlu0 2
      %388 = vperm.xlu0 %387, %v240
      %v389 = vpop.permute.xlu0 %388
      %391 = vset.pattern.permute.xlu0 2
      %392 = vperm.xlu0 %391, %v241
      %v393 = vpop.permute.xlu0 %392
      %395 = vset.pattern.permute.xlu0 2
      %396 = vperm.xlu0 %395, %v242
      %v397 = vpop.permute.xlu0 %396
      %399 = vset.pattern.permute.xlu0 2
      %400 = vperm.xlu0 %399, %v243
      %v401 = vpop.permute.xlu0 %400
      %403 = vset.pattern.permute.xlu0 2
      %404 = vperm.xlu0 %403, %v244
      %v405 = vpop.permute.xlu0 %404
      %v407 = vlaneseq
      %v408 = vshrl.u32 %v407, 7
      %v409 = vsub.s32 2, %v408
      %v410 = vrot.slane %v245, %v409
      %v411 = vsub.f32 %v377, %v410
      %v412 = vsub.f32 %v381, %v410
      %v413 = vsub.f32 %v385, %v410
      %v414 = vsub.f32 %v389, %v410
      %v415 = vsub.f32 %v393, %v410
      %v416 = vsub.f32 %v397, %v410
      %v417 = vsub.f32 %v401, %v410
      %v418 = vsub.f32 %v405, %v410
      %v419 = vmul.f32 %v411, %v411
      %v420 = vmul.f32 %v412, %v412
      %v421 = vmul.f32 %v413, %v413
      %v422 = vmul.f32 %v414, %v414
      %v423 = vmul.f32 %v415, %v415
      %v424 = vmul.f32 %v416, %v416
      %v425 = vmul.f32 %v417, %v417
      %v426 = vmul.f32 %v418, %v418
      %v427 = vadd.f32 %v367, %v419
      %v428 = vadd.f32 %v368, %v420
      %v429 = vadd.f32 %v369, %v421
      %v430 = vadd.f32 %v370, %v422
      %v431 = vadd.f32 %v371, %v423
      %v432 = vadd.f32 %v372, %v424
      %v433 = vadd.f32 %v373, %v425
      %v434 = vadd.f32 %v374, %v426
      %vm435 = vcmp.lt.f32.partialorder %v427, 0.1225
      %vm436 = vcmp.lt.f32.partialorder %v428, 0.1225
      %vm437 = vcmp.lt.f32.partialorder %v429, 0.1225
      %vm438 = vcmp.lt.f32.partialorder %v430, 0.1225
      %vm439 = vcmp.lt.f32.partialorder %v431, 0.1225
      %vm440 = vcmp.lt.f32.partialorder %v432, 0.1225
      %vm441 = vcmp.lt.f32.partialorder %v433, 0.1225
      %vm442 = vcmp.lt.f32.partialorder %v434, 0.1225
      %v443 = vsel %vm435, 1, 0
      %v444 = vsel %vm436, 1, 0
      %v445 = vsel %vm437, 1, 0
      %v446 = vsel %vm438, 1, 0
      %v447 = vsel %vm439, 1, 0
      %v448 = vsel %vm440, 1, 0
      %v449 = vsel %vm441, 1, 0
      %v450 = vsel %vm442, 1, 0
      %vm451 = vcmask 1040384
      %v452 = vrot.slane %v443, 7
      %v453 = vrot.slane %v444, 7
      %v454 = vsel %vm451, %v452, %v453
      %v455 = vrot.slane %v445, 7
      %v456 = vsel %vm451, %v453, %v455
      %v457 = vrot.slane %v446, 7
      %v458 = vsel %vm451, %v455, %v457
      %v459 = vrot.slane %v447, 7
      %v460 = vsel %vm451, %v457, %v459
      %v461 = vrot.slane %v448, 7
      %v462 = vsel %vm451, %v459, %v461
      %v463 = vrot.slane %v449, 7
      %v464 = vsel %vm451, %v461, %v463
      %v465 = vrot.slane %v450, 7
      %v466 = vsel %vm451, %v463, %v465
      %v467 = vsel %vm451, 0, %v452
      %v468 = vadd.s32 %v443, %v467
      %v469 = vadd.s32 %v444, %v454
      %v470 = vadd.s32 %v445, %v456
      %v471 = vadd.s32 %v446, %v458
      %v472 = vadd.s32 %v447, %v460
      %v473 = vadd.s32 %v448, %v462
      %v474 = vadd.s32 %v449, %v464
      %v475 = vadd.s32 %v450, %v466
      %vm476 = vcmask 1041408
      %v477 = vrot.slane %v468, 6
      %v478 = vrot.slane %v469, 6
      %v479 = vsel %vm476, %v477, %v478
      %v480 = vrot.slane %v470, 6
      %v481 = vsel %vm476, %v478, %v480
      %v482 = vrot.slane %v471, 6
      %v483 = vsel %vm476, %v480, %v482
      %v484 = vrot.slane %v472, 6
      %v485 = vsel %vm476, %v482, %v484
      %v486 = vrot.slane %v473, 6
      %v487 = vsel %vm476, %v484, %v486
      %v488 = vrot.slane %v474, 6
      %v489 = vsel %vm476, %v486, %v488
      %v490 = vrot.slane %v475, 6
      %v491 = vsel %vm476, %v488, %v490
      %v492 = vsel %vm476, 0, %v477
      %v493 = vadd.s32 %v468, %v492
      %v494 = vadd.s32 %v469, %v479
      %v495 = vadd.s32 %v470, %v481
      %v496 = vadd.s32 %v471, %v483
      %v497 = vadd.s32 %v472, %v485
      %v498 = vadd.s32 %v473, %v487
      %v499 = vadd.s32 %v474, %v489
      %v500 = vadd.s32 %v475, %v491
      %vm501 = vcmask 1043456
      %v502 = vrot.slane %v493, 4
      %v503 = vrot.slane %v494, 4
      %v504 = vsel %vm501, %v502, %v503
      %v505 = vrot.slane %v495, 4
      %v506 = vsel %vm501, %v503, %v505
      %v507 = vrot.slane %v496, 4
      %v508 = vsel %vm501, %v505, %v507
      %v509 = vrot.slane %v497, 4
      %v510 = vsel %vm501, %v507, %v509
      %v511 = vrot.slane %v498, 4
      %v512 = vsel %vm501, %v509, %v511
      %v513 = vrot.slane %v499, 4
      %v514 = vsel %vm501, %v511, %v513
      %v515 = vrot.slane %v500, 4
      %v516 = vsel %vm501, %v513, %v515
      %v517 = vsel %vm501, 0, %v502
      %v518 = vadd.s32 %v493, %v517
      %v519 = vadd.s32 %v494, %v504
      %v520 = vadd.s32 %v495, %v506
      %v521 = vadd.s32 %v496, %v508
      %v522 = vadd.s32 %v497, %v510
      %v523 = vadd.s32 %v498, %v512
      %v524 = vadd.s32 %v499, %v514
      %v525 = vadd.s32 %v500, %v516
      %v526 = vadd.s32 %v519, %v518
      %v527 = vadd.s32 %v520, %v519
      %v528 = vadd.s32 %v521, %v520
      %v529 = vadd.s32 %v522, %v521
      %v530 = vadd.s32 %v523, %v522
      %v531 = vadd.s32 %v524, %v523
      %v532 = vadd.s32 %v525, %v524
      %v533 = vadd.s32 %v527, %v518
      %v534 = vadd.s32 %v528, %v526
      %v535 = vadd.s32 %v529, %v527
      %v536 = vadd.s32 %v530, %v528
      %v537 = vadd.s32 %v531, %v529
      %v538 = vadd.s32 %v532, %v530
      %v539 = vadd.s32 %v535, %v518
      %v540 = vadd.s32 %v536, %v526
      %v541 = vadd.s32 %v537, %v533
      %v542 = vadd.s32 %v538, %v534
      %v543 = vlaneseq
      %v544 = vshrl.u32 %v543, 7
      %v545 = vadd.s32 %v544, 8
      %v546 = vadd.s32 %v544, 16
      %v547 = vadd.s32 %v544, 24
      %v548 = vadd.s32 %v544, 32
      %v549 = vadd.s32 %v544, 40
      %v550 = vadd.s32 %v544, 48
      %v551 = vadd.s32 %v544, 56
      %vm552 = vcmp.eq.s32.totalorder %v544, 0
      %vm553 = vcmp.eq.s32.totalorder %v545, 0
      %vm554 = vcmp.eq.s32.totalorder %v546, 0
      %vm555 = vcmp.eq.s32.totalorder %v547, 0
      %vm556 = vcmp.eq.s32.totalorder %v548, 0
      %vm557 = vcmp.eq.s32.totalorder %v549, 0
      %vm558 = vcmp.eq.s32.totalorder %v550, 0
      %vm559 = vcmp.eq.s32.totalorder %v551, 0
      %vm560 = vcmp.eq.s32.totalorder %v542, 0
      %v561 = vsel %vm560, 1, 0
      %v562 = vlaneseq
      %v563 = vshrl.u32 %v562, 7
      %v564 = vsub.s32 7, %v563
      %v565 = vrot.slane %v561, %v564
      %vm566 = vcmp.eq.s32.totalorder %v565, 1
      %v567 = vsel %vm552, 1, 0
      %v568 = vsel %vm553, 1, 0
      %v569 = vsel %vm554, 1, 0
      %v570 = vsel %vm555, 1, 0
      %v571 = vsel %vm556, 1, 0
      %v572 = vsel %vm557, 1, 0
      %v573 = vsel %vm558, 1, 0
      %v574 = vsel %vm559, 1, 0
      %vm575 = vcmp.eq.s32.totalorder %v567, 1
      %vm576 = vcmp.eq.s32.totalorder %v568, 1
      %vm577 = vcmp.eq.s32.totalorder %v569, 1
      %vm578 = vcmp.eq.s32.totalorder %v570, 1
      %vm579 = vcmp.eq.s32.totalorder %v571, 1
      %vm580 = vcmp.eq.s32.totalorder %v572, 1
      %vm581 = vcmp.eq.s32.totalorder %v573, 1
      %vm582 = vcmp.eq.s32.totalorder %v574, 1
      %vm583 = vmand %vm566, %vm575
      %vm584 = vmand %vm566, %vm576
      %vm585 = vmand %vm566, %vm577
      %vm586 = vmand %vm566, %vm578
      %vm587 = vmand %vm566, %vm579
      %vm588 = vmand %vm566, %vm580
      %vm589 = vmand %vm566, %vm581
      %vm590 = vmand %vm566, %vm582
      %vm591 = vcmp.eq.s32.totalorder %v518, 1
      %vm592 = vcmp.eq.s32.totalorder %v526, 1
      %vm593 = vcmp.eq.s32.totalorder %v533, 1
      %vm594 = vcmp.eq.s32.totalorder %v534, 1
      %vm595 = vcmp.eq.s32.totalorder %v539, 1
      %vm596 = vcmp.eq.s32.totalorder %v540, 1
      %vm597 = vcmp.eq.s32.totalorder %v541, 1
      %vm598 = vcmp.eq.s32.totalorder %v542, 1
      %vm599 = vmand %vm435, %vm591
      %vm600 = vmand %vm436, %vm592
      %vm601 = vmand %vm437, %vm593
      %vm602 = vmand %vm438, %vm594
      %vm603 = vmand %vm439, %vm595
      %vm604 = vmand %vm440, %vm596
      %vm605 = vmand %vm441, %vm597
      %vm606 = vmand %vm442, %vm598
      %vm607 = vcmask 1042432
      %v608 = vsel %vm607, %v245, 0.0
      %v609 = vpack.c.bf16 %v246, %v246
      %v610 = vunpack.c.l.bf16 %v609
      %v611 = vsub.f32 %v246, %v610
      %v612 = vpack.c.bf16 %v611, %v611
      %vm613 = vcmp.le.s32.totalorder %v542, 0
      %v614 = vsel %vm613, 1, 0
      %v615 = vlaneseq
      %v616 = vshrl.u32 %v615, 7
      %v617 = vsub.s32 7, %v616
      %v618 = vrot.slane %v614, %v617
      %vm619 = vcmp.eq.s32.totalorder %v618, 1
      %vm620 = vmand %vm599, %vm619
      %vm621 = vmand %vm600, %vm619
      %vm622 = vmand %vm601, %vm619
      %vm623 = vmand %vm602, %vm619
      %vm624 = vmand %vm603, %vm619
      %vm625 = vmand %vm604, %vm619
      %vm626 = vmand %vm605, %vm619
      %vm627 = vmand %vm606, %vm619
      %vm628 = vmor %vm599, %vm620
      %vm629 = vmor %vm600, %vm621
      %vm630 = vmor %vm601, %vm622
      %vm631 = vmor %vm602, %vm623
      %vm632 = vmor %vm603, %vm624
      %vm633 = vmor %vm604, %vm625
      %vm634 = vmor %vm605, %vm626
      %vm635 = vmor %vm606, %vm627
      %vm636 = vmor %vm628, %vm583
      %vm637 = vmor %vm629, %vm584
      %vm638 = vmor %vm630, %vm585
      %vm639 = vmor %vm631, %vm586
      %vm640 = vmor %vm632, %vm587
      %vm641 = vmor %vm633, %vm588
      %vm642 = vmor %vm634, %vm589
      %vm643 = vmor %vm635, %vm590
      %v644 = vsel %vm636, 1, 0
      %v645 = vsel %vm637, 1, 0
      %v646 = vsel %vm638, 1, 0
      %v647 = vsel %vm639, 1, 0
      %v648 = vsel %vm640, 1, 0
      %v649 = vsel %vm641, 1, 0
      %v650 = vsel %vm642, 1, 0
      %v651 = vsel %vm643, 1, 0
      %v652 = vcvt.s32.f32 %v644
      %v653 = vcvt.s32.f32 %v645
      %v654 = vcvt.s32.f32 %v646
      %v655 = vcvt.s32.f32 %v647
      %v656 = vcvt.s32.f32 %v648
      %v657 = vcvt.s32.f32 %v649
      %v658 = vcvt.s32.f32 %v650
      %v659 = vcvt.s32.f32 %v651
      %v660 = vpack.c.bf16 %v653, %v652
      %v661 = vpack.c.bf16 %v655, %v654
      %v662 = vpack.c.bf16 %v657, %v656
      %v663 = vpack.c.bf16 %v659, %v658
      %vm664 = vcmask 523264
      %v666 = vsel %vm664, %v612, 0
      %668 = vmatprep.subr.bf16.mxu0 0
      %669 = vmatpush1.bf16.msra.mxu0 %v660
      %670 = vmatprep.subr.bf16.mxu0 0
      %671 = vmatpush1.bf16.msra.mxu0 %v661
      %672 = vmatprep.subr.bf16.mxu0 0
      %673 = vmatpush1.bf16.msra.mxu0 %v662
      %674 = vmatprep.subr.bf16.mxu0 0
      %675 = vmatpush1.bf16.msra.mxu0 %v663
      %676 = vmatprep.subr.bf16.mxu0 0
      %677 = vmatpush1.bf16.msra.mxu0 0
      %678 = vmatprep.subr.bf16.mxu0 0
      %679 = vmatpush1.bf16.msra.mxu0 0
      %680 = vmatprep.subr.bf16.mxu0 0
      %681 = vmatpush1.bf16.msra.mxu0 0
      %682 = vmatprep.subr.bf16.mxu0 0
      %683 = vmatpush1.bf16.msra.mxu0 0
      %684 = vmatprep.subr.bf16.mxu0 0
      %685 = vmatpush1.bf16.msra.mxu0 0
      %686 = vmatprep.subr.bf16.mxu0 0
      %687 = vmatpush1.bf16.msra.mxu0 0
      %688 = vmatprep.subr.bf16.mxu0 0
      %689 = vmatpush1.bf16.msra.mxu0 0
      %690 = vmatprep.subr.bf16.mxu0 0
      %691 = vmatpush1.bf16.msra.mxu0 0
      %692 = vmatprep.subr.bf16.mxu0 0
      %693 = vmatpush1.bf16.msra.mxu0 0
      %694 = vmatprep.subr.bf16.mxu0 0
      %695 = vmatpush1.bf16.msra.mxu0 0
      %696 = vmatprep.subr.bf16.mxu0 0
      %697 = vmatpush1.bf16.msra.mxu0 0
      %698 = vmatprep.subr.bf16.mxu0 0
      %699 = vmatpush1.bf16.msra.mxu0 0
      %700 = vmatprep.mubr.bf16.mxu0 0
      %701 = vmatmul.mubr.bf16.gmra.mrb[0].mxu0 %v666
      %v702 = vpop.f32.mrb[0].mxu0
      %v703 = vadd.f32 0.0, %v702
      %v704 = vpop.f32.mrb[0].mxu0
      %v705 = vpop.f32.mrb[0].mxu0
      %v706 = vpop.f32.mrb[0].mxu0
      %707 = vdwg.mxu0
      %v709 = vsel %vm664, %v609, 0
      %711 = vmatprep.subr.bf16.mxu0 0
      %712 = vmatpush1.bf16.msra.mxu0 %v660
      %713 = vmatprep.subr.bf16.mxu0 0
      %714 = vmatpush1.bf16.msra.mxu0 %v661
      %715 = vmatprep.subr.bf16.mxu0 0
      %716 = vmatpush1.bf16.msra.mxu0 %v662
      %717 = vmatprep.subr.bf16.mxu0 0
      %718 = vmatpush1.bf16.msra.mxu0 %v663
      %719 = vmatprep.subr.bf16.mxu0 0
      %720 = vmatpush1.bf16.msra.mxu0 0
      %721 = vmatprep.subr.bf16.mxu0 0
      %722 = vmatpush1.bf16.msra.mxu0 0
      %723 = vmatprep.subr.bf16.mxu0 0
      %724 = vmatpush1.bf16.msra.mxu0 0
      %725 = vmatprep.subr.bf16.mxu0 0
      %726 = vmatpush1.bf16.msra.mxu0 0
      %727 = vmatprep.subr.bf16.mxu0 0
      %728 = vmatpush1.bf16.msra.mxu0 0
      %729 = vmatprep.subr.bf16.mxu0 0
      %730 = vmatpush1.bf16.msra.mxu0 0
      %731 = vmatprep.subr.bf16.mxu0 0
      %732 = vmatpush1.bf16.msra.mxu0 0
      %733 = vmatprep.subr.bf16.mxu0 0
      %734 = vmatpush1.bf16.msra.mxu0 0
      %735 = vmatprep.subr.bf16.mxu0 0
      %736 = vmatpush1.bf16.msra.mxu0 0
      %737 = vmatprep.subr.bf16.mxu0 0
      %738 = vmatpush1.bf16.msra.mxu0 0
      %739 = vmatprep.subr.bf16.mxu0 0
      %740 = vmatpush1.bf16.msra.mxu0 0
      %741 = vmatprep.subr.bf16.mxu0 0
      %742 = vmatpush1.bf16.msra.mxu0 0
      %743 = vmatprep.mubr.bf16.mxu0 0
      %744 = vmatmul.mubr.bf16.gmra.mrb[0].mxu0 %v709
      %v745 = vpop.f32.mrb[0].mxu0
      %v746 = vadd.f32 %v703, %v745
      %v747 = vpop.f32.mrb[0].mxu0
      %v748 = vpop.f32.mrb[0].mxu0
      %v749 = vpop.f32.mrb[0].mxu0
      %750 = vdwg.mxu0
      %v751 = vsub.f32 %v746, %v608
      %vm752 = vcmask 129024
      %753 = vst.msk [vmem:[%s235] sm:$0x7f] %vm752, %v751
      %vm754 = vcmp.eq.s32.totalorder %v518, 2
      %vm755 = vcmp.eq.s32.totalorder %v526, 2
      %vm756 = vcmp.eq.s32.totalorder %v533, 2
      %vm757 = vcmp.eq.s32.totalorder %v534, 2
      %vm758 = vcmp.eq.s32.totalorder %v539, 2
      %vm759 = vcmp.eq.s32.totalorder %v540, 2
      %vm760 = vcmp.eq.s32.totalorder %v541, 2
      %vm761 = vcmp.eq.s32.totalorder %v542, 2
      %vm762 = vmand %vm435, %vm754
      %vm763 = vmand %vm436, %vm755
      %vm764 = vmand %vm437, %vm756
      %vm765 = vmand %vm438, %vm757
      %vm766 = vmand %vm439, %vm758
      %vm767 = vmand %vm440, %vm759
      %vm768 = vmand %vm441, %vm760
      %vm769 = vmand %vm442, %vm761
      %vm770 = vcmp.le.s32.totalorder %v542, 1
      %v771 = vsel %vm770, 1, 0
      %v772 = vlaneseq
      %v773 = vshrl.u32 %v772, 7
      %v774 = vsub.s32 7, %v773
      %v775 = vrot.slane %v771, %v774
      %vm776 = vcmp.eq.s32.totalorder %v775, 1
      %vm777 = vmand %vm599, %vm776
      %vm778 = vmand %vm600, %vm776
      %vm779 = vmand %vm601, %vm776
      %vm780 = vmand %vm602, %vm776
      %vm781 = vmand %vm603, %vm776
      %vm782 = vmand %vm604, %vm776
      %vm783 = vmand %vm605, %vm776
      %vm784 = vmand %vm606, %vm776
      %vm785 = vmor %vm762, %vm777
      %vm786 = vmor %vm763, %vm778
      %vm787 = vmor %vm764, %vm779
      %vm788 = vmor %vm765, %vm780
      %vm789 = vmor %vm766, %vm781
      %vm790 = vmor %vm767, %vm782
      %vm791 = vmor %vm768, %vm783
      %vm792 = vmor %vm769, %vm784
      %vm793 = vmor %vm785, %vm583
      %vm794 = vmor %vm786, %vm584
      %vm795 = vmor %vm787, %vm585
      %vm796 = vmor %vm788, %vm586
      %vm797 = vmor %vm789, %vm587
      %vm798 = vmor %vm790, %vm588
      %vm799 = vmor %vm791, %vm589
      %vm800 = vmor %vm792, %vm590
      %v801 = vsel %vm793, 1, 0
      %v802 = vsel %vm794, 1, 0
      %v803 = vsel %vm795, 1, 0
      %v804 = vsel %vm796, 1, 0
      %v805 = vsel %vm797, 1, 0
      %v806 = vsel %vm798, 1, 0
      %v807 = vsel %vm799, 1, 0
      %v808 = vsel %vm800, 1, 0
      %v809 = vcvt.s32.f32 %v801
      %v810 = vcvt.s32.f32 %v802
      %v811 = vcvt.s32.f32 %v803
      %v812 = vcvt.s32.f32 %v804
      %v813 = vcvt.s32.f32 %v805
      %v814 = vcvt.s32.f32 %v806
      %v815 = vcvt.s32.f32 %v807
      %v816 = vcvt.s32.f32 %v808
      %v817 = vpack.c.bf16 %v810, %v809
      %v818 = vpack.c.bf16 %v812, %v811
      %v819 = vpack.c.bf16 %v814, %v813
      %v820 = vpack.c.bf16 %v816, %v815
      %821 = vmatprep.subr.bf16.mxu0 0
      %822 = vmatpush1.bf16.msra.mxu0 %v817
      %823 = vmatprep.subr.bf16.mxu0 0
      %824 = vmatpush1.bf16.msra.mxu0 %v818
      %825 = vmatprep.subr.bf16.mxu0 0
      %826 = vmatpush1.bf16.msra.mxu0 %v819
      %827 = vmatprep.subr.bf16.mxu0 0
      %828 = vmatpush1.bf16.msra.mxu0 %v820
      %829 = vmatprep.subr.bf16.mxu0 0
      %830 = vmatpush1.bf16.msra.mxu0 0
      %831 = vmatprep.subr.bf16.mxu0 0
      %832 = vmatpush1.bf16.msra.mxu0 0
      %833 = vmatprep.subr.bf16.mxu0 0
      %834 = vmatpush1.bf16.msra.mxu0 0
      %835 = vmatprep.subr.bf16.mxu0 0
      %836 = vmatpush1.bf16.msra.mxu0 0
      %837 = vmatprep.subr.bf16.mxu0 0
      %838 = vmatpush1.bf16.msra.mxu0 0
      %839 = vmatprep.subr.bf16.mxu0 0
      %840 = vmatpush1.bf16.msra.mxu0 0
      %841 = vmatprep.subr.bf16.mxu0 0
      %842 = vmatpush1.bf16.msra.mxu0 0
      %843 = vmatprep.subr.bf16.mxu0 0
      %844 = vmatpush1.bf16.msra.mxu0 0
      %845 = vmatprep.subr.bf16.mxu0 0
      %846 = vmatpush1.bf16.msra.mxu0 0
      %847 = vmatprep.subr.bf16.mxu0 0
      %848 = vmatpush1.bf16.msra.mxu0 0
      %849 = vmatprep.subr.bf16.mxu0 0
      %850 = vmatpush1.bf16.msra.mxu0 0
      %851 = vmatprep.subr.bf16.mxu0 0
      %852 = vmatpush1.bf16.msra.mxu0 0
      %853 = vmatprep.mubr.bf16.mxu0 0
      %854 = vmatmul.mubr.bf16.gmra.mrb[0].mxu0 %v666
      %v855 = vpop.f32.mrb[0].mxu0
      %v856 = vadd.f32 0.0, %v855
      %v857 = vpop.f32.mrb[0].mxu0
      %v858 = vpop.f32.mrb[0].mxu0
      %v859 = vpop.f32.mrb[0].mxu0
      %860 = vdwg.mxu0
      %861 = vmatprep.subr.bf16.mxu0 0
      %862 = vmatpush1.bf16.msra.mxu0 %v817
      %863 = vmatprep.subr.bf16.mxu0 0
      %864 = vmatpush1.bf16.msra.mxu0 %v818
      %865 = vmatprep.subr.bf16.mxu0 0
      %866 = vmatpush1.bf16.msra.mxu0 %v819
      %867 = vmatprep.subr.bf16.mxu0 0
      %868 = vmatpush1.bf16.msra.mxu0 %v820
      %869 = vmatprep.subr.bf16.mxu0 0
      %870 = vmatpush1.bf16.msra.mxu0 0
      %871 = vmatprep.subr.bf16.mxu0 0
      %872 = vmatpush1.bf16.msra.mxu0 0
      %873 = vmatprep.subr.bf16.mxu0 0
      %874 = vmatpush1.bf16.msra.mxu0 0
      %875 = vmatprep.subr.bf16.mxu0 0
      %876 = vmatpush1.bf16.msra.mxu0 0
      %877 = vmatprep.subr.bf16.mxu0 0
      %878 = vmatpush1.bf16.msra.mxu0 0
      %879 = vmatprep.subr.bf16.mxu0 0
      %880 = vmatpush1.bf16.msra.mxu0 0
      %881 = vmatprep.subr.bf16.mxu0 0
      %882 = vmatpush1.bf16.msra.mxu0 0
      %883 = vmatprep.subr.bf16.mxu0 0
      %884 = vmatpush1.bf16.msra.mxu0 0
      %885 = vmatprep.subr.bf16.mxu0 0
      %886 = vmatpush1.bf16.msra.mxu0 0
      %887 = vmatprep.subr.bf16.mxu0 0
      %888 = vmatpush1.bf16.msra.mxu0 0
      %889 = vmatprep.subr.bf16.mxu0 0
      %890 = vmatpush1.bf16.msra.mxu0 0
      %891 = vmatprep.subr.bf16.mxu0 0
      %892 = vmatpush1.bf16.msra.mxu0 0
      %893 = vmatprep.mubr.bf16.mxu0 0
      %894 = vmatmul.mubr.bf16.gmra.mrb[0].mxu0 %v709
      %v895 = vpop.f32.mrb[0].mxu0
      %v896 = vadd.f32 %v856, %v895
      %v897 = vpop.f32.mrb[0].mxu0
      %v898 = vpop.f32.mrb[0].mxu0
      %v899 = vpop.f32.mrb[0].mxu0
      %900 = vdwg.mxu0
      %v901 = vsub.f32 %v896, %v608
      %s902 = scalar_lea.vmem %s235, 8
      %903 = vst.msk [vmem:[%s902] sm:$0x7f] %vm752, %v901
      %vm904 = vcmp.eq.s32.totalorder %v518, 3
      %vm905 = vcmp.eq.s32.totalorder %v526, 3
      %vm906 = vcmp.eq.s32.totalorder %v533, 3
      %vm907 = vcmp.eq.s32.totalorder %v534, 3
      %vm908 = vcmp.eq.s32.totalorder %v539, 3
      %vm909 = vcmp.eq.s32.totalorder %v540, 3
      %vm910 = vcmp.eq.s32.totalorder %v541, 3
      %vm911 = vcmp.eq.s32.totalorder %v542, 3
      %vm912 = vmand %vm435, %vm904
      %vm913 = vmand %vm436, %vm905
      %vm914 = vmand %vm437, %vm906
      %vm915 = vmand %vm438, %vm907
      %vm916 = vmand %vm439, %vm908
      %vm917 = vmand %vm440, %vm909
      %vm918 = vmand %vm441, %vm910
      %vm919 = vmand %vm442, %vm911
      %vm920 = vcmp.le.s32.totalorder %v542, 2
      %v921 = vsel %vm920, 1, 0
      %v922 = vlaneseq
      %v923 = vshrl.u32 %v922, 7
      %v924 = vsub.s32 7, %v923
      %v925 = vrot.slane %v921, %v924
      %vm926 = vcmp.eq.s32.totalorder %v925, 1
      %vm927 = vmand %vm599, %vm926
      %vm928 = vmand %vm600, %vm926
      %vm929 = vmand %vm601, %vm926
      %vm930 = vmand %vm602, %vm926
      %vm931 = vmand %vm603, %vm926
      %vm932 = vmand %vm604, %vm926
      %vm933 = vmand %vm605, %vm926
      %vm934 = vmand %vm606, %vm926
      %vm935 = vmor %vm912, %vm927
      %vm936 = vmor %vm913, %vm928
      %vm937 = vmor %vm914, %vm929
      %vm938 = vmor %vm915, %vm930
      %vm939 = vmor %vm916, %vm931
      %vm940 = vmor %vm917, %vm932
      %vm941 = vmor %vm918, %vm933
      %vm942 = vmor %vm919, %vm934
      %vm943 = vmor %vm935, %vm583
      %vm944 = vmor %vm936, %vm584
      %vm945 = vmor %vm937, %vm585
      %vm946 = vmor %vm938, %vm586
      %vm947 = vmor %vm939, %vm587
      %vm948 = vmor %vm940, %vm588
      %vm949 = vmor %vm941, %vm589
      %vm950 = vmor %vm942, %vm590
      %v951 = vsel %vm943, 1, 0
      %v952 = vsel %vm944, 1, 0
      %v953 = vsel %vm945, 1, 0
      %v954 = vsel %vm946, 1, 0
      %v955 = vsel %vm947, 1, 0
      %v956 = vsel %vm948, 1, 0
      %v957 = vsel %vm949, 1, 0
      %v958 = vsel %vm950, 1, 0
      %v959 = vcvt.s32.f32 %v951
      %v960 = vcvt.s32.f32 %v952
      %v961 = vcvt.s32.f32 %v953
      %v962 = vcvt.s32.f32 %v954
      %v963 = vcvt.s32.f32 %v955
      %v964 = vcvt.s32.f32 %v956
      %v965 = vcvt.s32.f32 %v957
      %v966 = vcvt.s32.f32 %v958
      %v967 = vpack.c.bf16 %v960, %v959
      %v968 = vpack.c.bf16 %v962, %v961
      %v969 = vpack.c.bf16 %v964, %v963
      %v970 = vpack.c.bf16 %v966, %v965
      %971 = vmatprep.subr.bf16.mxu0 0
      %972 = vmatpush1.bf16.msra.mxu0 %v967
      %973 = vmatprep.subr.bf16.mxu0 0
      %974 = vmatpush1.bf16.msra.mxu0 %v968
      %975 = vmatprep.subr.bf16.mxu0 0
      %976 = vmatpush1.bf16.msra.mxu0 %v969
      %977 = vmatprep.subr.bf16.mxu0 0
      %978 = vmatpush1.bf16.msra.mxu0 %v970
      %979 = vmatprep.subr.bf16.mxu0 0
      %980 = vmatpush1.bf16.msra.mxu0 0
      %981 = vmatprep.subr.bf16.mxu0 0
      %982 = vmatpush1.bf16.msra.mxu0 0
      %983 = vmatprep.subr.bf16.mxu0 0
      %984 = vmatpush1.bf16.msra.mxu0 0
      %985 = vmatprep.subr.bf16.mxu0 0
      %986 = vmatpush1.bf16.msra.mxu0 0
      %987 = vmatprep.subr.bf16.mxu0 0
      %988 = vmatpush1.bf16.msra.mxu0 0
      %989 = vmatprep.subr.bf16.mxu0 0
      %990 = vmatpush1.bf16.msra.mxu0 0
      %991 = vmatprep.subr.bf16.mxu0 0
      %992 = vmatpush1.bf16.msra.mxu0 0
      %993 = vmatprep.subr.bf16.mxu0 0
      %994 = vmatpush1.bf16.msra.mxu0 0
      %995 = vmatprep.subr.bf16.mxu0 0
      %996 = vmatpush1.bf16.msra.mxu0 0
      %997 = vmatprep.subr.bf16.mxu0 0
      %998 = vmatpush1.bf16.msra.mxu0 0
      %999 = vmatprep.subr.bf16.mxu0 0
      %1000 = vmatpush1.bf16.msra.mxu0 0
      %1001 = vmatprep.subr.bf16.mxu0 0
      %1002 = vmatpush1.bf16.msra.mxu0 0
      %1003 = vmatprep.mubr.bf16.mxu0 0
      %1004 = vmatmul.mubr.bf16.gmra.mrb[0].mxu0 %v666
      %v1005 = vpop.f32.mrb[0].mxu0
      %v1006 = vadd.f32 0.0, %v1005
      %v1007 = vpop.f32.mrb[0].mxu0
      %v1008 = vpop.f32.mrb[0].mxu0
      %v1009 = vpop.f32.mrb[0].mxu0
      %1010 = vdwg.mxu0
      %1011 = vmatprep.subr.bf16.mxu0 0
      %1012 = vmatpush1.bf16.msra.mxu0 %v967
      %1013 = vmatprep.subr.bf16.mxu0 0
      %1014 = vmatpush1.bf16.msra.mxu0 %v968
      %1015 = vmatprep.subr.bf16.mxu0 0
      %1016 = vmatpush1.bf16.msra.mxu0 %v969
      %1017 = vmatprep.subr.bf16.mxu0 0
      %1018 = vmatpush1.bf16.msra.mxu0 %v970
      %1019 = vmatprep.subr.bf16.mxu0 0
      %1020 = vmatpush1.bf16.msra.mxu0 0
      %1021 = vmatprep.subr.bf16.mxu0 0
      %1022 = vmatpush1.bf16.msra.mxu0 0
      %1023 = vmatprep.subr.bf16.mxu0 0
      %1024 = vmatpush1.bf16.msra.mxu0 0
      %1025 = vmatprep.subr.bf16.mxu0 0
      %1026 = vmatpush1.bf16.msra.mxu0 0
      %1027 = vmatprep.subr.bf16.mxu0 0
      %1028 = vmatpush1.bf16.msra.mxu0 0
      %1029 = vmatprep.subr.bf16.mxu0 0
      %1030 = vmatpush1.bf16.msra.mxu0 0
      %1031 = vmatprep.subr.bf16.mxu0 0
      %1032 = vmatpush1.bf16.msra.mxu0 0
      %1033 = vmatprep.subr.bf16.mxu0 0
      %1034 = vmatpush1.bf16.msra.mxu0 0
      %1035 = vmatprep.subr.bf16.mxu0 0
      %1036 = vmatpush1.bf16.msra.mxu0 0
      %1037 = vmatprep.subr.bf16.mxu0 0
      %1038 = vmatpush1.bf16.msra.mxu0 0
      %1039 = vmatprep.subr.bf16.mxu0 0
      %1040 = vmatpush1.bf16.msra.mxu0 0
      %1041 = vmatprep.subr.bf16.mxu0 0
      %1042 = vmatpush1.bf16.msra.mxu0 0
      %1043 = vmatprep.mubr.bf16.mxu0 0
      %1044 = vmatmul.mubr.bf16.gmra.mrb[0].mxu0 %v709
      %v1045 = vpop.f32.mrb[0].mxu0
      %v1046 = vadd.f32 %v1006, %v1045
      %v1047 = vpop.f32.mrb[0].mxu0
      %v1048 = vpop.f32.mrb[0].mxu0
      %v1049 = vpop.f32.mrb[0].mxu0
      %1050 = vdwg.mxu0
      %v1051 = vsub.f32 %v1046, %v608
      %s1052 = scalar_lea.vmem %s235, 16
      %1053 = vst.msk [vmem:[%s1052] sm:$0x7f] %vm752, %v1051
      %vm1054 = vcmp.eq.s32.totalorder %v518, 4
      %vm1055 = vcmp.eq.s32.totalorder %v526, 4
      %vm1056 = vcmp.eq.s32.totalorder %v533, 4
      %vm1057 = vcmp.eq.s32.totalorder %v534, 4
      %vm1058 = vcmp.eq.s32.totalorder %v539, 4
      %vm1059 = vcmp.eq.s32.totalorder %v540, 4
      %vm1060 = vcmp.eq.s32.totalorder %v541, 4
      %vm1061 = vcmp.eq.s32.totalorder %v542, 4
      %vm1062 = vmand %vm435, %vm1054
      %vm1063 = vmand %vm436, %vm1055
      %vm1064 = vmand %vm437, %vm1056
      %vm1065 = vmand %vm438, %vm1057
      %vm1066 = vmand %vm439, %vm1058
      %vm1067 = vmand %vm440, %vm1059
      %vm1068 = vmand %vm441, %vm1060
      %vm1069 = vmand %vm442, %vm1061
      %vm1070 = vcmp.le.s32.totalorder %v542, 3
      %v1071 = vsel %vm1070, 1, 0
      %v1072 = vlaneseq
      %v1073 = vshrl.u32 %v1072, 7
      %v1074 = vsub.s32 7, %v1073
      %v1075 = vrot.slane %v1071, %v1074
      %vm1076 = vcmp.eq.s32.totalorder %v1075, 1
      %vm1077 = vmand %vm599, %vm1076
      %vm1078 = vmand %vm600, %vm1076
      %vm1079 = vmand %vm601, %vm1076
      %vm1080 = vmand %vm602, %vm1076
      %vm1081 = vmand %vm603, %vm1076
      %vm1082 = vmand %vm604, %vm1076
      %vm1083 = vmand %vm605, %vm1076
      %vm1084 = vmand %vm606, %vm1076
      %vm1085 = vmor %vm1062, %vm1077
      %vm1086 = vmor %vm1063, %vm1078
      %vm1087 = vmor %vm1064, %vm1079
      %vm1088 = vmor %vm1065, %vm1080
      %vm1089 = vmor %vm1066, %vm1081
      %vm1090 = vmor %vm1067, %vm1082
      %vm1091 = vmor %vm1068, %vm1083
      %vm1092 = vmor %vm1069, %vm1084
      %vm1093 = vmor %vm1085, %vm583
      %vm1094 = vmor %vm1086, %vm584
      %vm1095 = vmor %vm1087, %vm585
      %vm1096 = vmor %vm1088, %vm586
      %vm1097 = vmor %vm1089, %vm587
      %vm1098 = vmor %vm1090, %vm588
      %vm1099 = vmor %vm1091, %vm589
      %vm1100 = vmor %vm1092, %vm590
      %v1101 = vsel %vm1093, 1, 0
      %v1102 = vsel %vm1094, 1, 0
      %v1103 = vsel %vm1095, 1, 0
      %v1104 = vsel %vm1096, 1, 0
      %v1105 = vsel %vm1097, 1, 0
      %v1106 = vsel %vm1098, 1, 0
      %v1107 = vsel %vm1099, 1, 0
      %v1108 = vsel %vm1100, 1, 0
      %v1109 = vcvt.s32.f32 %v1101
      %v1110 = vcvt.s32.f32 %v1102
      %v1111 = vcvt.s32.f32 %v1103
      %v1112 = vcvt.s32.f32 %v1104
      %v1113 = vcvt.s32.f32 %v1105
      %v1114 = vcvt.s32.f32 %v1106
      %v1115 = vcvt.s32.f32 %v1107
      %v1116 = vcvt.s32.f32 %v1108
      %v1117 = vpack.c.bf16 %v1110, %v1109
      %v1118 = vpack.c.bf16 %v1112, %v1111
      %v1119 = vpack.c.bf16 %v1114, %v1113
      %v1120 = vpack.c.bf16 %v1116, %v1115
      %1121 = vmatprep.subr.bf16.mxu0 0
      %1122 = vmatpush1.bf16.msra.mxu0 %v1117
      %1123 = vmatprep.subr.bf16.mxu0 0
      %1124 = vmatpush1.bf16.msra.mxu0 %v1118
      %1125 = vmatprep.subr.bf16.mxu0 0
      %1126 = vmatpush1.bf16.msra.mxu0 %v1119
      %1127 = vmatprep.subr.bf16.mxu0 0
      %1128 = vmatpush1.bf16.msra.mxu0 %v1120
      %1129 = vmatprep.subr.bf16.mxu0 0
      %1130 = vmatpush1.bf16.msra.mxu0 0
      %1131 = vmatprep.subr.bf16.mxu0 0
      %1132 = vmatpush1.bf16.msra.mxu0 0
      %1133 = vmatprep.subr.bf16.mxu0 0
      %1134 = vmatpush1.bf16.msra.mxu0 0
      %1135 = vmatprep.subr.bf16.mxu0 0
      %1136 = vmatpush1.bf16.msra.mxu0 0
      %1137 = vmatprep.subr.bf16.mxu0 0
      %1138 = vmatpush1.bf16.msra.mxu0 0
      %1139 = vmatprep.subr.bf16.mxu0 0
      %1140 = vmatpush1.bf16.msra.mxu0 0
      %1141 = vmatprep.subr.bf16.mxu0 0
      %1142 = vmatpush1.bf16.msra.mxu0 0
      %1143 = vmatprep.subr.bf16.mxu0 0
      %1144 = vmatpush1.bf16.msra.mxu0 0
      %1145 = vmatprep.subr.bf16.mxu0 0
      %1146 = vmatpush1.bf16.msra.mxu0 0
      %1147 = vmatprep.subr.bf16.mxu0 0
      %1148 = vmatpush1.bf16.msra.mxu0 0
      %1149 = vmatprep.subr.bf16.mxu0 0
      %1150 = vmatpush1.bf16.msra.mxu0 0
      %1151 = vmatprep.subr.bf16.mxu0 0
      %1152 = vmatpush1.bf16.msra.mxu0 0
      %1153 = vmatprep.mubr.bf16.mxu0 0
      %1154 = vmatmul.mubr.bf16.gmra.mrb[0].mxu0 %v666
      %v1155 = vpop.f32.mrb[0].mxu0
      %v1156 = vadd.f32 0.0, %v1155
      %v1157 = vpop.f32.mrb[0].mxu0
      %v1158 = vpop.f32.mrb[0].mxu0
      %v1159 = vpop.f32.mrb[0].mxu0
      %1160 = vdwg.mxu0
      %1161 = vmatprep.subr.bf16.mxu0 0
      %1162 = vmatpush1.bf16.msra.mxu0 %v1117
      %1163 = vmatprep.subr.bf16.mxu0 0
      %1164 = vmatpush1.bf16.msra.mxu0 %v1118
      %1165 = vmatprep.subr.bf16.mxu0 0
      %1166 = vmatpush1.bf16.msra.mxu0 %v1119
      %1167 = vmatprep.subr.bf16.mxu0 0
      %1168 = vmatpush1.bf16.msra.mxu0 %v1120
      %1169 = vmatprep.subr.bf16.mxu0 0
      %1170 = vmatpush1.bf16.msra.mxu0 0
      %1171 = vmatprep.subr.bf16.mxu0 0
      %1172 = vmatpush1.bf16.msra.mxu0 0
      %1173 = vmatprep.subr.bf16.mxu0 0
      %1174 = vmatpush1.bf16.msra.mxu0 0
      %1175 = vmatprep.subr.bf16.mxu0 0
      %1176 = vmatpush1.bf16.msra.mxu0 0
      %1177 = vmatprep.subr.bf16.mxu0 0
      %1178 = vmatpush1.bf16.msra.mxu0 0
      %1179 = vmatprep.subr.bf16.mxu0 0
      %1180 = vmatpush1.bf16.msra.mxu0 0
      %1181 = vmatprep.subr.bf16.mxu0 0
      %1182 = vmatpush1.bf16.msra.mxu0 0
      %1183 = vmatprep.subr.bf16.mxu0 0
      %1184 = vmatpush1.bf16.msra.mxu0 0
      %1185 = vmatprep.subr.bf16.mxu0 0
      %1186 = vmatpush1.bf16.msra.mxu0 0
      %1187 = vmatprep.subr.bf16.mxu0 0
      %1188 = vmatpush1.bf16.msra.mxu0 0
      %1189 = vmatprep.subr.bf16.mxu0 0
      %1190 = vmatpush1.bf16.msra.mxu0 0
      %1191 = vmatprep.subr.bf16.mxu0 0
      %1192 = vmatpush1.bf16.msra.mxu0 0
      %1193 = vmatprep.mubr.bf16.mxu0 0
      %1194 = vmatmul.mubr.bf16.gmra.mrb[0].mxu0 %v709
      %v1195 = vpop.f32.mrb[0].mxu0
      %v1196 = vadd.f32 %v1156, %v1195
      %v1197 = vpop.f32.mrb[0].mxu0
      %v1198 = vpop.f32.mrb[0].mxu0
      %v1199 = vpop.f32.mrb[0].mxu0
      %1200 = vdwg.mxu0
      %v1201 = vsub.f32 %v1196, %v608
      %s1202 = scalar_lea.vmem %s235, 24
      %1203 = vst.msk [vmem:[%s1202] sm:$0x7f] %vm752, %v1201
      %vm1204 = vcmp.eq.s32.totalorder %v518, 5
      %vm1205 = vcmp.eq.s32.totalorder %v526, 5
      %vm1206 = vcmp.eq.s32.totalorder %v533, 5
      %vm1207 = vcmp.eq.s32.totalorder %v534, 5
      %vm1208 = vcmp.eq.s32.totalorder %v539, 5
      %vm1209 = vcmp.eq.s32.totalorder %v540, 5
      %vm1210 = vcmp.eq.s32.totalorder %v541, 5
      %vm1211 = vcmp.eq.s32.totalorder %v542, 5
      %vm1212 = vmand %vm435, %vm1204
      %vm1213 = vmand %vm436, %vm1205
      %vm1214 = vmand %vm437, %vm1206
      %vm1215 = vmand %vm438, %vm1207
      %vm1216 = vmand %vm439, %vm1208
      %vm1217 = vmand %vm440, %vm1209
      %vm1218 = vmand %vm441, %vm1210
      %vm1219 = vmand %vm442, %vm1211
      %vm1220 = vcmp.le.s32.totalorder %v542, 4
      %v1221 = vsel %vm1220, 1, 0
      %v1222 = vlaneseq
      %v1223 = vshrl.u32 %v1222, 7
      %v1224 = vsub.s32 7, %v1223
      %v1225 = vrot.slane %v1221, %v1224
      %vm1226 = vcmp.eq.s32.totalorder %v1225, 1
      %vm1227 = vmand %vm599, %vm1226
      %vm1228 = vmand %vm600, %vm1226
      %vm1229 = vmand %vm601, %vm1226
      %vm1230 = vmand %vm602, %vm1226
      %vm1231 = vmand %vm603, %vm1226
      %vm1232 = vmand %vm604, %vm1226
      %vm1233 = vmand %vm605, %vm1226
      %vm1234 = vmand %vm606, %vm1226
      %vm1235 = vmor %vm1212, %vm1227
      %vm1236 = vmor %vm1213, %vm1228
      %vm1237 = vmor %vm1214, %vm1229
      %vm1238 = vmor %vm1215, %vm1230
      %vm1239 = vmor %vm1216, %vm1231
      %vm1240 = vmor %vm1217, %vm1232
      %vm1241 = vmor %vm1218, %vm1233
      %vm1242 = vmor %vm1219, %vm1234
      %vm1243 = vmor %vm1235, %vm583
      %vm1244 = vmor %vm1236, %vm584
      %vm1245 = vmor %vm1237, %vm585
      %vm1246 = vmor %vm1238, %vm586
      %vm1247 = vmor %vm1239, %vm587
      %vm1248 = vmor %vm1240, %vm588
      %vm1249 = vmor %vm1241, %vm589
      %vm1250 = vmor %vm1242, %vm590
      %v1251 = vsel %vm1243, 1, 0
      %v1252 = vsel %vm1244, 1, 0
      %v1253 = vsel %vm1245, 1, 0
      %v1254 = vsel %vm1246, 1, 0
      %v1255 = vsel %vm1247, 1, 0
      %v1256 = vsel %vm1248, 1, 0
      %v1257 = vsel %vm1249, 1, 0
      %v1258 = vsel %vm1250, 1, 0
      %v1259 = vcvt.s32.f32 %v1251
      %v1260 = vcvt.s32.f32 %v1252
      %v1261 = vcvt.s32.f32 %v1253
      %v1262 = vcvt.s32.f32 %v1254
      %v1263 = vcvt.s32.f32 %v1255
      %v1264 = vcvt.s32.f32 %v1256
      %v1265 = vcvt.s32.f32 %v1257
      %v1266 = vcvt.s32.f32 %v1258
      %v1267 = vpack.c.bf16 %v1260, %v1259
      %v1268 = vpack.c.bf16 %v1262, %v1261
      %v1269 = vpack.c.bf16 %v1264, %v1263
      %v1270 = vpack.c.bf16 %v1266, %v1265
      %1271 = vmatprep.subr.bf16.mxu0 0
      %1272 = vmatpush1.bf16.msra.mxu0 %v1267
      %1273 = vmatprep.subr.bf16.mxu0 0
      %1274 = vmatpush1.bf16.msra.mxu0 %v1268
      %1275 = vmatprep.subr.bf16.mxu0 0
      %1276 = vmatpush1.bf16.msra.mxu0 %v1269
      %1277 = vmatprep.subr.bf16.mxu0 0
      %1278 = vmatpush1.bf16.msra.mxu0 %v1270
      %1279 = vmatprep.subr.bf16.mxu0 0
      %1280 = vmatpush1.bf16.msra.mxu0 0
      %1281 = vmatprep.subr.bf16.mxu0 0
      %1282 = vmatpush1.bf16.msra.mxu0 0
      %1283 = vmatprep.subr.bf16.mxu0 0
      %1284 = vmatpush1.bf16.msra.mxu0 0
      %1285 = vmatprep.subr.bf16.mxu0 0
      %1286 = vmatpush1.bf16.msra.mxu0 0
      %1287 = vmatprep.subr.bf16.mxu0 0
      %1288 = vmatpush1.bf16.msra.mxu0 0
      %1289 = vmatprep.subr.bf16.mxu0 0
      %1290 = vmatpush1.bf16.msra.mxu0 0
      %1291 = vmatprep.subr.bf16.mxu0 0
      %1292 = vmatpush1.bf16.msra.mxu0 0
      %1293 = vmatprep.subr.bf16.mxu0 0
      %1294 = vmatpush1.bf16.msra.mxu0 0
      %1295 = vmatprep.subr.bf16.mxu0 0
      %1296 = vmatpush1.bf16.msra.mxu0 0
      %1297 = vmatprep.subr.bf16.mxu0 0
      %1298 = vmatpush1.bf16.msra.mxu0 0
      %1299 = vmatprep.subr.bf16.mxu0 0
      %1300 = vmatpush1.bf16.msra.mxu0 0
      %1301 = vmatprep.subr.bf16.mxu0 0
      %1302 = vmatpush1.bf16.msra.mxu0 0
      %1303 = vmatprep.mubr.bf16.mxu0 0
      %1304 = vmatmul.mubr.bf16.gmra.mrb[0].mxu0 %v666
      %v1305 = vpop.f32.mrb[0].mxu0
      %v1306 = vadd.f32 0.0, %v1305
      %v1307 = vpop.f32.mrb[0].mxu0
      %v1308 = vpop.f32.mrb[0].mxu0
      %v1309 = vpop.f32.mrb[0].mxu0
      %1310 = vdwg.mxu0
      %1311 = vmatprep.subr.bf16.mxu0 0
      %1312 = vmatpush1.bf16.msra.mxu0 %v1267
      %1313 = vmatprep.subr.bf16.mxu0 0
      %1314 = vmatpush1.bf16.msra.mxu0 %v1268
      %1315 = vmatprep.subr.bf16.mxu0 0
      %1316 = vmatpush1.bf16.msra.mxu0 %v1269
      %1317 = vmatprep.subr.bf16.mxu0 0
      %1318 = vmatpush1.bf16.msra.mxu0 %v1270
      %1319 = vmatprep.subr.bf16.mxu0 0
      %1320 = vmatpush1.bf16.msra.mxu0 0
      %1321 = vmatprep.subr.bf16.mxu0 0
      %1322 = vmatpush1.bf16.msra.mxu0 0
      %1323 = vmatprep.subr.bf16.mxu0 0
      %1324 = vmatpush1.bf16.msra.mxu0 0
      %1325 = vmatprep.subr.bf16.mxu0 0
      %1326 = vmatpush1.bf16.msra.mxu0 0
      %1327 = vmatprep.subr.bf16.mxu0 0
      %1328 = vmatpush1.bf16.msra.mxu0 0
      %1329 = vmatprep.subr.bf16.mxu0 0
      %1330 = vmatpush1.bf16.msra.mxu0 0
      %1331 = vmatprep.subr.bf16.mxu0 0
      %1332 = vmatpush1.bf16.msra.mxu0 0
      %1333 = vmatprep.subr.bf16.mxu0 0
      %1334 = vmatpush1.bf16.msra.mxu0 0
      %1335 = vmatprep.subr.bf16.mxu0 0
      %1336 = vmatpush1.bf16.msra.mxu0 0
      %1337 = vmatprep.subr.bf16.mxu0 0
      %1338 = vmatpush1.bf16.msra.mxu0 0
      %1339 = vmatprep.subr.bf16.mxu0 0
      %1340 = vmatpush1.bf16.msra.mxu0 0
      %1341 = vmatprep.subr.bf16.mxu0 0
      %1342 = vmatpush1.bf16.msra.mxu0 0
      %1343 = vmatprep.mubr.bf16.mxu0 0
      %1344 = vmatmul.mubr.bf16.gmra.mrb[0].mxu0 %v709
      %v1345 = vpop.f32.mrb[0].mxu0
      %v1346 = vadd.f32 %v1306, %v1345
      %v1347 = vpop.f32.mrb[0].mxu0
      %v1348 = vpop.f32.mrb[0].mxu0
      %v1349 = vpop.f32.mrb[0].mxu0
      %1350 = vdwg.mxu0
      %v1351 = vsub.f32 %v1346, %v608
      %s1352 = scalar_lea.vmem %s235, 32
      %1353 = vst.msk [vmem:[%s1352] sm:$0x7f] %vm752, %v1351
      %vm1354 = vcmp.eq.s32.totalorder %v518, 6
      %vm1355 = vcmp.eq.s32.totalorder %v526, 6
      %vm1356 = vcmp.eq.s32.totalorder %v533, 6
      %vm1357 = vcmp.eq.s32.totalorder %v534, 6
      %vm1358 = vcmp.eq.s32.totalorder %v539, 6
      %vm1359 = vcmp.eq.s32.totalorder %v540, 6
      %vm1360 = vcmp.eq.s32.totalorder %v541, 6
      %vm1361 = vcmp.eq.s32.totalorder %v542, 6
      %vm1362 = vmand %vm435, %vm1354
      %vm1363 = vmand %vm436, %vm1355
      %vm1364 = vmand %vm437, %vm1356
      %vm1365 = vmand %vm438, %vm1357
      %vm1366 = vmand %vm439, %vm1358
      %vm1367 = vmand %vm440, %vm1359
      %vm1368 = vmand %vm441, %vm1360
      %vm1369 = vmand %vm442, %vm1361
      %vm1370 = vcmp.le.s32.totalorder %v542, 5
      %v1371 = vsel %vm1370, 1, 0
      %v1372 = vlaneseq
      %v1373 = vshrl.u32 %v1372, 7
      %v1374 = vsub.s32 7, %v1373
      %v1375 = vrot.slane %v1371, %v1374
      %vm1376 = vcmp.eq.s32.totalorder %v1375, 1
      %vm1377 = vmand %vm599, %vm1376
      %vm1378 = vmand %vm600, %vm1376
      %vm1379 = vmand %vm601, %vm1376
      %vm1380 = vmand %vm602, %vm1376
      %vm1381 = vmand %vm603, %vm1376
      %vm1382 = vmand %vm604, %vm1376
      %vm1383 = vmand %vm605, %vm1376
      %vm1384 = vmand %vm606, %vm1376
      %vm1385 = vmor %vm1362, %vm1377
      %vm1386 = vmor %vm1363, %vm1378
      %vm1387 = vmor %vm1364, %vm1379
      %vm1388 = vmor %vm1365, %vm1380
      %vm1389 = vmor %vm1366, %vm1381
      %vm1390 = vmor %vm1367, %vm1382
      %vm1391 = vmor %vm1368, %vm1383
      %vm1392 = vmor %vm1369, %vm1384
      %vm1393 = vmor %vm1385, %vm583
      %vm1394 = vmor %vm1386, %vm584
      %vm1395 = vmor %vm1387, %vm585
      %vm1396 = vmor %vm1388, %vm586
      %vm1397 = vmor %vm1389, %vm587
      %vm1398 = vmor %vm1390, %vm588
      %vm1399 = vmor %vm1391, %vm589
      %vm1400 = vmor %vm1392, %vm590
      %v1401 = vsel %vm1393, 1, 0
      %v1402 = vsel %vm1394, 1, 0
      %v1403 = vsel %vm1395, 1, 0
      %v1404 = vsel %vm1396, 1, 0
      %v1405 = vsel %vm1397, 1, 0
      %v1406 = vsel %vm1398, 1, 0
      %v1407 = vsel %vm1399, 1, 0
      %v1408 = vsel %vm1400, 1, 0
      %v1409 = vcvt.s32.f32 %v1401
      %v1410 = vcvt.s32.f32 %v1402
      %v1411 = vcvt.s32.f32 %v1403
      %v1412 = vcvt.s32.f32 %v1404
      %v1413 = vcvt.s32.f32 %v1405
      %v1414 = vcvt.s32.f32 %v1406
      %v1415 = vcvt.s32.f32 %v1407
      %v1416 = vcvt.s32.f32 %v1408
      %v1417 = vpack.c.bf16 %v1410, %v1409
      %v1418 = vpack.c.bf16 %v1412, %v1411
      %v1419 = vpack.c.bf16 %v1414, %v1413
      %v1420 = vpack.c.bf16 %v1416, %v1415
      %1421 = vmatprep.subr.bf16.mxu0 0
      %1422 = vmatpush1.bf16.msra.mxu0 %v1417
      %1423 = vmatprep.subr.bf16.mxu0 0
      %1424 = vmatpush1.bf16.msra.mxu0 %v1418
      %1425 = vmatprep.subr.bf16.mxu0 0
      %1426 = vmatpush1.bf16.msra.mxu0 %v1419
      %1427 = vmatprep.subr.bf16.mxu0 0
      %1428 = vmatpush1.bf16.msra.mxu0 %v1420
      %1429 = vmatprep.subr.bf16.mxu0 0
      %1430 = vmatpush1.bf16.msra.mxu0 0
      %1431 = vmatprep.subr.bf16.mxu0 0
      %1432 = vmatpush1.bf16.msra.mxu0 0
      %1433 = vmatprep.subr.bf16.mxu0 0
      %1434 = vmatpush1.bf16.msra.mxu0 0
      %1435 = vmatprep.subr.bf16.mxu0 0
      %1436 = vmatpush1.bf16.msra.mxu0 0
      %1437 = vmatprep.subr.bf16.mxu0 0
      %1438 = vmatpush1.bf16.msra.mxu0 0
      %1439 = vmatprep.subr.bf16.mxu0 0
      %1440 = vmatpush1.bf16.msra.mxu0 0
      %1441 = vmatprep.subr.bf16.mxu0 0
      %1442 = vmatpush1.bf16.msra.mxu0 0
      %1443 = vmatprep.subr.bf16.mxu0 0
      %1444 = vmatpush1.bf16.msra.mxu0 0
      %1445 = vmatprep.subr.bf16.mxu0 0
      %1446 = vmatpush1.bf16.msra.mxu0 0
      %1447 = vmatprep.subr.bf16.mxu0 0
      %1448 = vmatpush1.bf16.msra.mxu0 0
      %1449 = vmatprep.subr.bf16.mxu0 0
      %1450 = vmatpush1.bf16.msra.mxu0 0
      %1451 = vmatprep.subr.bf16.mxu0 0
      %1452 = vmatpush1.bf16.msra.mxu0 0
      %1453 = vmatprep.mubr.bf16.mxu0 0
      %1454 = vmatmul.mubr.bf16.gmra.mrb[0].mxu0 %v666
      %v1455 = vpop.f32.mrb[0].mxu0
      %v1456 = vadd.f32 0.0, %v1455
      %v1457 = vpop.f32.mrb[0].mxu0
      %v1458 = vpop.f32.mrb[0].mxu0
      %v1459 = vpop.f32.mrb[0].mxu0
      %1460 = vdwg.mxu0
      %1461 = vmatprep.subr.bf16.mxu0 0
      %1462 = vmatpush1.bf16.msra.mxu0 %v1417
      %1463 = vmatprep.subr.bf16.mxu0 0
      %1464 = vmatpush1.bf16.msra.mxu0 %v1418
      %1465 = vmatprep.subr.bf16.mxu0 0
      %1466 = vmatpush1.bf16.msra.mxu0 %v1419
      %1467 = vmatprep.subr.bf16.mxu0 0
      %1468 = vmatpush1.bf16.msra.mxu0 %v1420
      %1469 = vmatprep.subr.bf16.mxu0 0
      %1470 = vmatpush1.bf16.msra.mxu0 0
      %1471 = vmatprep.subr.bf16.mxu0 0
      %1472 = vmatpush1.bf16.msra.mxu0 0
      %1473 = vmatprep.subr.bf16.mxu0 0
      %1474 = vmatpush1.bf16.msra.mxu0 0
      %1475 = vmatprep.subr.bf16.mxu0 0
      %1476 = vmatpush1.bf16.msra.mxu0 0
      %1477 = vmatprep.subr.bf16.mxu0 0
      %1478 = vmatpush1.bf16.msra.mxu0 0
      %1479 = vmatprep.subr.bf16.mxu0 0
      %1480 = vmatpush1.bf16.msra.mxu0 0
      %1481 = vmatprep.subr.bf16.mxu0 0
      %1482 = vmatpush1.bf16.msra.mxu0 0
      %1483 = vmatprep.subr.bf16.mxu0 0
      %1484 = vmatpush1.bf16.msra.mxu0 0
      %1485 = vmatprep.subr.bf16.mxu0 0
      %1486 = vmatpush1.bf16.msra.mxu0 0
      %1487 = vmatprep.subr.bf16.mxu0 0
      %1488 = vmatpush1.bf16.msra.mxu0 0
      %1489 = vmatprep.subr.bf16.mxu0 0
      %1490 = vmatpush1.bf16.msra.mxu0 0
      %1491 = vmatprep.subr.bf16.mxu0 0
      %1492 = vmatpush1.bf16.msra.mxu0 0
      %1493 = vmatprep.mubr.bf16.mxu0 0
      %1494 = vmatmul.mubr.bf16.gmra.mrb[0].mxu0 %v709
      %v1495 = vpop.f32.mrb[0].mxu0
      %v1496 = vadd.f32 %v1456, %v1495
      %v1497 = vpop.f32.mrb[0].mxu0
      %v1498 = vpop.f32.mrb[0].mxu0
      %v1499 = vpop.f32.mrb[0].mxu0
      %1500 = vdwg.mxu0
      %v1501 = vsub.f32 %v1496, %v608
      %s1502 = scalar_lea.vmem %s235, 40
      %1503 = vst.msk [vmem:[%s1502] sm:$0x7f] %vm752, %v1501
      %vm1504 = vcmp.eq.s32.totalorder %v518, 7
      %vm1505 = vcmp.eq.s32.totalorder %v526, 7
      %vm1506 = vcmp.eq.s32.totalorder %v533, 7
      %vm1507 = vcmp.eq.s32.totalorder %v534, 7
      %vm1508 = vcmp.eq.s32.totalorder %v539, 7
      %vm1509 = vcmp.eq.s32.totalorder %v540, 7
      %vm1510 = vcmp.eq.s32.totalorder %v541, 7
      %vm1511 = vcmp.eq.s32.totalorder %v542, 7
      %vm1512 = vmand %vm435, %vm1504
      %vm1513 = vmand %vm436, %vm1505
      %vm1514 = vmand %vm437, %vm1506
      %vm1515 = vmand %vm438, %vm1507
      %vm1516 = vmand %vm439, %vm1508
      %vm1517 = vmand %vm440, %vm1509
      %vm1518 = vmand %vm441, %vm1510
      %vm1519 = vmand %vm442, %vm1511
      %vm1520 = vcmp.le.s32.totalorder %v542, 6
      %v1521 = vsel %vm1520, 1, 0
      %v1522 = vlaneseq
      %v1523 = vshrl.u32 %v1522, 7
      %v1524 = vsub.s32 7, %v1523
      %v1525 = vrot.slane %v1521, %v1524
      %vm1526 = vcmp.eq.s32.totalorder %v1525, 1
      %vm1527 = vmand %vm599, %vm1526
      %vm1528 = vmand %vm600, %vm1526
      %vm1529 = vmand %vm601, %vm1526
      %vm1530 = vmand %vm602, %vm1526
      %vm1531 = vmand %vm603, %vm1526
      %vm1532 = vmand %vm604, %vm1526
      %vm1533 = vmand %vm605, %vm1526
      %vm1534 = vmand %vm606, %vm1526
      %vm1535 = vmor %vm1512, %vm1527
      %vm1536 = vmor %vm1513, %vm1528
      %vm1537 = vmor %vm1514, %vm1529
      %vm1538 = vmor %vm1515, %vm1530
      %vm1539 = vmor %vm1516, %vm1531
      %vm1540 = vmor %vm1517, %vm1532
      %vm1541 = vmor %vm1518, %vm1533
      %vm1542 = vmor %vm1519, %vm1534
      %vm1543 = vmor %vm1535, %vm583
      %vm1544 = vmor %vm1536, %vm584
      %vm1545 = vmor %vm1537, %vm585
      %vm1546 = vmor %vm1538, %vm586
      %vm1547 = vmor %vm1539, %vm587
      %vm1548 = vmor %vm1540, %vm588
      %vm1549 = vmor %vm1541, %vm589
      %vm1550 = vmor %vm1542, %vm590
      %v1551 = vsel %vm1543, 1, 0
      %v1552 = vsel %vm1544, 1, 0
      %v1553 = vsel %vm1545, 1, 0
      %v1554 = vsel %vm1546, 1, 0
      %v1555 = vsel %vm1547, 1, 0
      %v1556 = vsel %vm1548, 1, 0
      %v1557 = vsel %vm1549, 1, 0
      %v1558 = vsel %vm1550, 1, 0
      %v1559 = vcvt.s32.f32 %v1551
      %v1560 = vcvt.s32.f32 %v1552
      %v1561 = vcvt.s32.f32 %v1553
      %v1562 = vcvt.s32.f32 %v1554
      %v1563 = vcvt.s32.f32 %v1555
      %v1564 = vcvt.s32.f32 %v1556
      %v1565 = vcvt.s32.f32 %v1557
      %v1566 = vcvt.s32.f32 %v1558
      %v1567 = vpack.c.bf16 %v1560, %v1559
      %v1568 = vpack.c.bf16 %v1562, %v1561
      %v1569 = vpack.c.bf16 %v1564, %v1563
      %v1570 = vpack.c.bf16 %v1566, %v1565
      %1571 = vmatprep.subr.bf16.mxu0 0
      %1572 = vmatpush1.bf16.msra.mxu0 %v1567
      %1573 = vmatprep.subr.bf16.mxu0 0
      %1574 = vmatpush1.bf16.msra.mxu0 %v1568
      %1575 = vmatprep.subr.bf16.mxu0 0
      %1576 = vmatpush1.bf16.msra.mxu0 %v1569
      %1577 = vmatprep.subr.bf16.mxu0 0
      %1578 = vmatpush1.bf16.msra.mxu0 %v1570
      %1579 = vmatprep.subr.bf16.mxu0 0
      %1580 = vmatpush1.bf16.msra.mxu0 0
      %1581 = vmatprep.subr.bf16.mxu0 0
      %1582 = vmatpush1.bf16.msra.mxu0 0
      %1583 = vmatprep.subr.bf16.mxu0 0
      %1584 = vmatpush1.bf16.msra.mxu0 0
      %1585 = vmatprep.subr.bf16.mxu0 0
      %1586 = vmatpush1.bf16.msra.mxu0 0
      %1587 = vmatprep.subr.bf16.mxu0 0
      %1588 = vmatpush1.bf16.msra.mxu0 0
      %1589 = vmatprep.subr.bf16.mxu0 0
      %1590 = vmatpush1.bf16.msra.mxu0 0
      %1591 = vmatprep.subr.bf16.mxu0 0
      %1592 = vmatpush1.bf16.msra.mxu0 0
      %1593 = vmatprep.subr.bf16.mxu0 0
      %1594 = vmatpush1.bf16.msra.mxu0 0
      %1595 = vmatprep.subr.bf16.mxu0 0
      %1596 = vmatpush1.bf16.msra.mxu0 0
      %1597 = vmatprep.subr.bf16.mxu0 0
      %1598 = vmatpush1.bf16.msra.mxu0 0
      %1599 = vmatprep.subr.bf16.mxu0 0
      %1600 = vmatpush1.bf16.msra.mxu0 0
      %1601 = vmatprep.subr.bf16.mxu0 0
      %1602 = vmatpush1.bf16.msra.mxu0 0
      %1603 = vmatprep.mubr.bf16.mxu0 0
      %1604 = vmatmul.mubr.bf16.gmra.mrb[0].mxu0 %v666
      %v1605 = vpop.f32.mrb[0].mxu0
      %v1606 = vadd.f32 0.0, %v1605
      %v1607 = vpop.f32.mrb[0].mxu0
      %v1608 = vpop.f32.mrb[0].mxu0
      %v1609 = vpop.f32.mrb[0].mxu0
      %1610 = vdwg.mxu0
      %1611 = vmatprep.subr.bf16.mxu0 0
      %1612 = vmatpush1.bf16.msra.mxu0 %v1567
      %1613 = vmatprep.subr.bf16.mxu0 0
      %1614 = vmatpush1.bf16.msra.mxu0 %v1568
      %1615 = vmatprep.subr.bf16.mxu0 0
      %1616 = vmatpush1.bf16.msra.mxu0 %v1569
      %1617 = vmatprep.subr.bf16.mxu0 0
      %1618 = vmatpush1.bf16.msra.mxu0 %v1570
      %1619 = vmatprep.subr.bf16.mxu0 0
      %1620 = vmatpush1.bf16.msra.mxu0 0
      %1621 = vmatprep.subr.bf16.mxu0 0
      %1622 = vmatpush1.bf16.msra.mxu0 0
      %1623 = vmatprep.subr.bf16.mxu0 0
      %1624 = vmatpush1.bf16.msra.mxu0 0
      %1625 = vmatprep.subr.bf16.mxu0 0
      %1626 = vmatpush1.bf16.msra.mxu0 0
      %1627 = vmatprep.subr.bf16.mxu0 0
      %1628 = vmatpush1.bf16.msra.mxu0 0
      %1629 = vmatprep.subr.bf16.mxu0 0
      %1630 = vmatpush1.bf16.msra.mxu0 0
      %1631 = vmatprep.subr.bf16.mxu0 0
      %1632 = vmatpush1.bf16.msra.mxu0 0
      %1633 = vmatprep.subr.bf16.mxu0 0
      %1634 = vmatpush1.bf16.msra.mxu0 0
      %1635 = vmatprep.subr.bf16.mxu0 0
      %1636 = vmatpush1.bf16.msra.mxu0 0
      %1637 = vmatprep.subr.bf16.mxu0 0
      %1638 = vmatpush1.bf16.msra.mxu0 0
      %1639 = vmatprep.subr.bf16.mxu0 0
      %1640 = vmatpush1.bf16.msra.mxu0 0
      %1641 = vmatprep.subr.bf16.mxu0 0
      %1642 = vmatpush1.bf16.msra.mxu0 0
      %1643 = vmatprep.mubr.bf16.mxu0 0
      %1644 = vmatmul.mubr.bf16.gmra.mrb[0].mxu0 %v709
      %v1645 = vpop.f32.mrb[0].mxu0
      %v1646 = vadd.f32 %v1606, %v1645
      %v1647 = vpop.f32.mrb[0].mxu0
      %v1648 = vpop.f32.mrb[0].mxu0
      %v1649 = vpop.f32.mrb[0].mxu0
      %1650 = vdwg.mxu0
      %v1651 = vsub.f32 %v1646, %v608
      %s1652 = scalar_lea.vmem %s235, 48
      %1653 = vst.msk [vmem:[%s1652] sm:$0x7f] %vm752, %v1651
      %vm1654 = vcmp.eq.s32.totalorder %v518, 8
      %vm1655 = vcmp.eq.s32.totalorder %v526, 8
      %vm1656 = vcmp.eq.s32.totalorder %v533, 8
      %vm1657 = vcmp.eq.s32.totalorder %v534, 8
      %vm1658 = vcmp.eq.s32.totalorder %v539, 8
      %vm1659 = vcmp.eq.s32.totalorder %v540, 8
      %vm1660 = vcmp.eq.s32.totalorder %v541, 8
      %vm1661 = vcmp.eq.s32.totalorder %v542, 8
      %vm1662 = vmand %vm435, %vm1654
      %vm1663 = vmand %vm436, %vm1655
      %vm1664 = vmand %vm437, %vm1656
      %vm1665 = vmand %vm438, %vm1657
      %vm1666 = vmand %vm439, %vm1658
      %vm1667 = vmand %vm440, %vm1659
      %vm1668 = vmand %vm441, %vm1660
      %vm1669 = vmand %vm442, %vm1661
      %vm1670 = vcmp.le.s32.totalorder %v542, 7
      %v1671 = vsel %vm1670, 1, 0
      %v1672 = vlaneseq
      %v1673 = vshrl.u32 %v1672, 7
      %v1674 = vsub.s32 7, %v1673
      %v1675 = vrot.slane %v1671, %v1674
      %vm1676 = vcmp.eq.s32.totalorder %v1675, 1
      %vm1677 = vmand %vm599, %vm1676
      %vm1678 = vmand %vm600, %vm1676
      %vm1679 = vmand %vm601, %vm1676
      %vm1680 = vmand %vm602, %vm1676
      %vm1681 = vmand %vm603, %vm1676
      %vm1682 = vmand %vm604, %vm1676
      %vm1683 = vmand %vm605, %vm1676
      %vm1684 = vmand %vm606, %vm1676
      %vm1685 = vmor %vm1662, %vm1677
      %vm1686 = vmor %vm1663, %vm1678
      %vm1687 = vmor %vm1664, %vm1679
      %vm1688 = vmor %vm1665, %vm1680
      %vm1689 = vmor %vm1666, %vm1681
      %vm1690 = vmor %vm1667, %vm1682
      %vm1691 = vmor %vm1668, %vm1683
      %vm1692 = vmor %vm1669, %vm1684
      %vm1693 = vmor %vm1685, %vm583
      %vm1694 = vmor %vm1686, %vm584
      %vm1695 = vmor %vm1687, %vm585
      %vm1696 = vmor %vm1688, %vm586
      %vm1697 = vmor %vm1689, %vm587
      %vm1698 = vmor %vm1690, %vm588
      %vm1699 = vmor %vm1691, %vm589
      %vm1700 = vmor %vm1692, %vm590
      %v1701 = vsel %vm1693, 1, 0
      %v1702 = vsel %vm1694, 1, 0
      %v1703 = vsel %vm1695, 1, 0
      %v1704 = vsel %vm1696, 1, 0
      %v1705 = vsel %vm1697, 1, 0
      %v1706 = vsel %vm1698, 1, 0
      %v1707 = vsel %vm1699, 1, 0
      %v1708 = vsel %vm1700, 1, 0
      %v1709 = vcvt.s32.f32 %v1701
      %v1710 = vcvt.s32.f32 %v1702
      %v1711 = vcvt.s32.f32 %v1703
      %v1712 = vcvt.s32.f32 %v1704
      %v1713 = vcvt.s32.f32 %v1705
      %v1714 = vcvt.s32.f32 %v1706
      %v1715 = vcvt.s32.f32 %v1707
      %v1716 = vcvt.s32.f32 %v1708
      %v1717 = vpack.c.bf16 %v1710, %v1709
      %v1718 = vpack.c.bf16 %v1712, %v1711
      %v1719 = vpack.c.bf16 %v1714, %v1713
      %v1720 = vpack.c.bf16 %v1716, %v1715
      %1721 = vmatprep.subr.bf16.mxu0 0
      %1722 = vmatpush1.bf16.msra.mxu0 %v1717
      %1723 = vmatprep.subr.bf16.mxu0 0
      %1724 = vmatpush1.bf16.msra.mxu0 %v1718
      %1725 = vmatprep.subr.bf16.mxu0 0
      %1726 = vmatpush1.bf16.msra.mxu0 %v1719
      %1727 = vmatprep.subr.bf16.mxu0 0
      %1728 = vmatpush1.bf16.msra.mxu0 %v1720
      %1729 = vmatprep.subr.bf16.mxu0 0
      %1730 = vmatpush1.bf16.msra.mxu0 0
      %1731 = vmatprep.subr.bf16.mxu0 0
      %1732 = vmatpush1.bf16.msra.mxu0 0
      %1733 = vmatprep.subr.bf16.mxu0 0
      %1734 = vmatpush1.bf16.msra.mxu0 0
      %1735 = vmatprep.subr.bf16.mxu0 0
      %1736 = vmatpush1.bf16.msra.mxu0 0
      %1737 = vmatprep.subr.bf16.mxu0 0
      %1738 = vmatpush1.bf16.msra.mxu0 0
      %1739 = vmatprep.subr.bf16.mxu0 0
      %1740 = vmatpush1.bf16.msra.mxu0 0
      %1741 = vmatprep.subr.bf16.mxu0 0
      %1742 = vmatpush1.bf16.msra.mxu0 0
      %1743 = vmatprep.subr.bf16.mxu0 0
      %1744 = vmatpush1.bf16.msra.mxu0 0
      %1745 = vmatprep.subr.bf16.mxu0 0
      %1746 = vmatpush1.bf16.msra.mxu0 0
      %1747 = vmatprep.subr.bf16.mxu0 0
      %1748 = vmatpush1.bf16.msra.mxu0 0
      %1749 = vmatprep.subr.bf16.mxu0 0
      %1750 = vmatpush1.bf16.msra.mxu0 0
      %1751 = vmatprep.subr.bf16.mxu0 0
      %1752 = vmatpush1.bf16.msra.mxu0 0
      %1753 = vmatprep.mubr.bf16.mxu0 0
      %1754 = vmatmul.mubr.bf16.gmra.mrb[0].mxu0 %v666
      %v1755 = vpop.f32.mrb[0].mxu0
      %v1756 = vadd.f32 0.0, %v1755
      %v1757 = vpop.f32.mrb[0].mxu0
      %v1758 = vpop.f32.mrb[0].mxu0
      %v1759 = vpop.f32.mrb[0].mxu0
      %1760 = vdwg.mxu0
      %1761 = vmatprep.subr.bf16.mxu0 0
      %1762 = vmatpush1.bf16.msra.mxu0 %v1717
      %1763 = vmatprep.subr.bf16.mxu0 0
      %1764 = vmatpush1.bf16.msra.mxu0 %v1718
      %1765 = vmatprep.subr.bf16.mxu0 0
      %1766 = vmatpush1.bf16.msra.mxu0 %v1719
      %1767 = vmatprep.subr.bf16.mxu0 0
      %1768 = vmatpush1.bf16.msra.mxu0 %v1720
      %1769 = vmatprep.subr.bf16.mxu0 0
      %1770 = vmatpush1.bf16.msra.mxu0 0
      %1771 = vmatprep.subr.bf16.mxu0 0
      %1772 = vmatpush1.bf16.msra.mxu0 0
      %1773 = vmatprep.subr.bf16.mxu0 0
      %1774 = vmatpush1.bf16.msra.mxu0 0
      %1775 = vmatprep.subr.bf16.mxu0 0
      %1776 = vmatpush1.bf16.msra.mxu0 0
      %1777 = vmatprep.subr.bf16.mxu0 0
      %1778 = vmatpush1.bf16.msra.mxu0 0
      %1779 = vmatprep.subr.bf16.mxu0 0
      %1780 = vmatpush1.bf16.msra.mxu0 0
      %1781 = vmatprep.subr.bf16.mxu0 0
      %1782 = vmatpush1.bf16.msra.mxu0 0
      %1783 = vmatprep.subr.bf16.mxu0 0
      %1784 = vmatpush1.bf16.msra.mxu0 0
      %1785 = vmatprep.subr.bf16.mxu0 0
      %1786 = vmatpush1.bf16.msra.mxu0 0
      %1787 = vmatprep.subr.bf16.mxu0 0
      %1788 = vmatpush1.bf16.msra.mxu0 0
      %1789 = vmatprep.subr.bf16.mxu0 0
      %1790 = vmatpush1.bf16.msra.mxu0 0
      %1791 = vmatprep.subr.bf16.mxu0 0
      %1792 = vmatpush1.bf16.msra.mxu0 0
      %1793 = vmatprep.mubr.bf16.mxu0 0
      %1794 = vmatmul.mubr.bf16.gmra.mrb[0].mxu0 %v709
      %v1795 = vpop.f32.mrb[0].mxu0
      %v1796 = vadd.f32 %v1756, %v1795
      %v1797 = vpop.f32.mrb[0].mxu0
      %v1798 = vpop.f32.mrb[0].mxu0
      %v1799 = vpop.f32.mrb[0].mxu0
      %1800 = vdwg.mxu0
      %v1801 = vsub.f32 %v1796, %v608
      %s1802 = scalar_lea.vmem %s235, 56
      %1803 = vst.msk [vmem:[%s1802] sm:$0x7f] %vm752, %v1801
      %p1804 = scmp.lt.s32.totalorder %s18, 1
      %s1805 = scalar_select %p1804, %s18, 1
      %p1806 = scmp.lt.s32.totalorder %s19, 0
      %s1807 = scalar_select %p1806, %s19, 0
      %s1808 = smul.addr %s1805, 8
      %s1809 = sadd.s32 %s1807, %s1808
      %s1810 = smul.addr %s1809, 8
      %s1811 = scalar_lea.vmem %s3, %s1810
      // Predicated region
      $region33: #{tpu_custom_call.1} parent=31 // pred_check
        %p1812 = pneg %p126
      $region34: #{tpu_custom_call.1} parent=31 // pred_check_branch
        %1814 = sbr.rel (%p1812) target = $region36
      $region35: #{tpu_custom_call.1} parent=31 // pred_region
        _
      $region36: #{tpu_custom_call.1} parent=31 // pred_fallthru
        _
    $region32: #{tpu_custom_call.1} parent=5 // pred_fallthru
      _
    %p1815 = scmp.le.s32.totalorder 2, %s9
    // Predicated region
    $region37: #{tpu_custom_call.1} parent=5 // pred_check
      %p1816 = pneg %p1815
    $region38: #{tpu_custom_call.1} parent=5 // pred_check_branch
      %1818 = sbr.rel (%p1816) target = $region40
    $region39: #{tpu_custom_call.1} parent=5 // pred_region
      %s1819 = ssub.s32 %s9, 2
      // Predicated region
      $region41: #{tpu_custom_call.1} parent=39 // pred_check
        %p1820 = pneg %p132
      $region42: #{tpu_custom_call.1} parent=39 // pred_check_branch
        %1822 = sbr.rel (%p1820) target = $region44
      $region43: #{tpu_custom_call.1} parent=39 // pred_region
        %p1823 = scmp.lt.s32.totalorder %s20, 1
        %s1824 = scalar_select %p1823, %s20, 1
        %p1825 = scmp.lt.s32.totalorder %s21, 0
        %s1826 = scalar_select %p1825, %s21, 0
        %s1827 = smul.addr %s1824, 8
        %s1828 = sadd.s32 %s1826, %s1827
        %s1829 = smul.addr %s1828, 8
        %s1830 = scalar_lea.vmem %s3, %s1829
      $region44: #{tpu_custom_call.1} parent=39 // pred_fallthru
        _
    $region40: #{tpu_custom_call.1} parent=5 // pred_fallthru
      _
  $region6: #{tpu_custom_call.1} parent=0 // loop_footer
    %s13 = sadd.s32 1, %s9
  $region7: #{tpu_custom_call.1} parent=0 // loop_footer_branch
    %8 = sbr.rel target = $region3
  $region8: #{tpu_custom_call.1} parent=0 // loop_exit
    _

</llo_original>
